<compile_context>
chip_gen: v7x
topology: tpu7x:2x2x1
jax: 0.10.0
libtpu: 0.0.40
codegen_flags: <defaults>
</compile_context>

<pallas_src>
import jax
import jax.numpy as jnp
from jax.experimental import pallas as pl
from jax.experimental.pallas import tpu as pltpu

# TPU-friendly problem sizes implied by the module's forward().
B = 8        # batch (>= one full f32 sublane tile)
I = 32       # input_size  (word-embedding dim)
H = 32       # hidden_size
C = 64       # ctx_size    (encoder context dim)
S = 16       # source sequence length
V = 128      # dict_size   (vocabulary)


def _sigmoid(x):
    # numerically stable, EUP tanh based
    return 0.5 * (jnp.tanh(0.5 * x) + 1.0)


def lstm4ot_decoder_kernel(
    # per-step activations (indexed by grid step t)
    y_emb_ref, y_mask_ref,
    # step-invariant activations (constant index_map -> VMEM-resident)
    hc0_ref, ctx_ref, pctx_ref, att_bias_ref,
    # fused LSTMCell gate params, columns permuted to (i, f, o | g)
    w_gate_ref, b_gate_ref,
    # fused second-gate params [Ux^T ; Wx^T] (order i, f, o | c) and bx
    w_ifoc_ref, bx_ref,
    # attention params (pctx already holds Wc_att / b_att)
    w_comb_ref, u_att_ref,
    # word-prob head (single fused K = H+C+I = 128 weight)
    w_proj_ref, b_proj_ref,
    # outputs
    y_pred_ref, hc_out_ref,
    # scratch: f32 packed [h | c] carried across grid steps
    hc_acc_ref,
):
    f32 = jnp.float32
    bf16 = jnp.bfloat16
    t = pl.program_id(0)

    @pl.when(t == 0)
    def _init():
        hc_acc_ref[...] = hc0_ref[...]

    y_emb = y_emb_ref[...]                      # (B, I)
    y_mask = y_mask_ref[...]                    # (B, 1)
    hc = hc_acc_ref[...]                        # (B, 2H) f32 carried state
    h0 = hc[:, :H]
    c0 = hc[:, H:]

    # ---- self.lstm_1 : nn.LSTMCell, fused matmul, gates permuted (i,f,o|g) ----
    xin = jnp.concatenate([y_emb, h0], axis=1).astype(bf16)               # (B, I+H)
    gates = jnp.dot(xin, w_gate_ref[...], preferred_element_type=f32) + b_gate_ref[...]
    sg = _sigmoid(gates[:, :3 * H])                                       # one sigmoid call
    i_g = sg[:, :H]
    f_g = sg[:, H:2 * H]
    o_g = sg[:, 2 * H:]
    g_g = jnp.tanh(gates[:, 3 * H:])                                      # one tanh call
    c1 = f_g * c0 + i_g * g_g
    h1 = o_g * jnp.tanh(c1)
    h1 = y_mask * h1 + (1.0 - y_mask) * h0
    c1 = y_mask * c1 + (1.0 - y_mask) * c0

    # ---- get_word_atten (no coverage), additive mask bias, vectorized over S ----
    s_cat = jnp.concatenate([h1, c1], axis=1).astype(bf16)                # (B, 2H)
    h_comb = jnp.dot(s_cat, w_comb_ref[...], preferred_element_type=f32)  # (B, C)
    u = jnp.tanh(pctx_ref[...] + h_comb[None, :, :])                      # (S, B, C)
    logits = jnp.sum(u * u_att_ref[...], axis=-1, keepdims=True) + att_bias_ref[...]
    m = jnp.max(logits, axis=0, keepdims=True)
    e = jnp.exp(logits - m)                                               # masked -> 0
    denom = jnp.sum(e, axis=0, keepdims=True)
    w_att = e * pl.reciprocal(denom, approx=True)                         # (S, B, 1)
    atted = jnp.sum(w_att * ctx_ref[...], axis=0)                         # (B, C)

    # ---- second gate update: order (i, f, o | c) ----
    ha = jnp.concatenate([h1, atted], axis=1).astype(bf16)                # (B, H+C)
    ifoc = jnp.dot(ha, w_ifoc_ref[...], preferred_element_type=f32) + bx_ref[...]
    sg2 = _sigmoid(ifoc[:, :3 * H])                                       # one sigmoid call
    i2 = sg2[:, :H]
    f2 = sg2[:, H:2 * H]
    o2 = sg2[:, 2 * H:]
    c2 = f2 * c1 + i2 * jnp.tanh(ifoc[:, 3 * H:])
    h2 = o2 * jnp.tanh(c2)
    c2 = y_mask * c2 + (1.0 - y_mask) * c1
    h2 = y_mask * h2 + (1.0 - y_mask) * h1

    # ---- word-prob head: single K=128 matmul over [h2 | atted | y_emb] ----
    # TODO(synk): WordProbLayerInDecoder's class body is not in the reference source;
    # implemented as the standard non-copy PGNet head softmax(proj(cat(s, att, y_emb))).
    feat = jnp.concatenate([h2, atted, y_emb], axis=1).astype(bf16)       # (B, 128)
    vlog = jnp.dot(feat, w_proj_ref[...], preferred_element_type=f32) + b_proj_ref[...]
    vlog = vlog - jnp.max(vlog, axis=1, keepdims=True)
    ev = jnp.exp(vlog)
    y_pred_ref[...] = ev / jnp.sum(ev, axis=1, keepdims=True)             # exact normalization

    hc_new = jnp.concatenate([h2, c2], axis=1)                            # packed (B, 2H)
    hc_acc_ref[...] = hc_new
    hc_out_ref[...] = hc_new


# --------------------- one-time kernel weight preparation --------------------
def prepare_kernel_params(p):
    """Fuse / permute / pre-transpose / bf16-cast weights once (outside decode)."""
    bf16 = jnp.bfloat16

    def reorder_ifgo(w):
        # PyTorch LSTMCell row order (i, f, g, o) -> (i, f, o, g)
        return jnp.concatenate([w[:H], w[H:2 * H], w[3 * H:], w[2 * H:3 * H]], axis=0)

    w_gate = jnp.concatenate(
        [reorder_ifgo(p["w_ih"]).T, reorder_ifgo(p["w_hh"]).T], axis=0).astype(bf16)  # (I+H, 4H)
    b_gate = reorder_ifgo(p["b_ih"] + p["b_hh"])[None, :]                              # (1, 4H)
    w_ifoc = jnp.concatenate([p["ux"].T, p["wx"].T], axis=0).astype(bf16)              # (H+C, 4H)
    return {
        "w_gate": w_gate,
        "b_gate": b_gate,
        "w_ifoc": w_ifoc,
        "bx": p["bx"][None, :],                        # (1, 4H)
        "w_comb": p["w_comb_att"].T.astype(bf16),      # (2H, C)
        "u_att": p["u_att"],                           # (1, C)
        "w_proj": p["w_proj"].T.astype(bf16),          # (H+C+I, V) single fused head weight
        "b_proj": p["b_proj"][None, :],                # (1, V)
        "wc_att": p["wc_att"],                         # (C, C)  f32 (pctx precompute)
        "b_att": p["b_att"],                           # (C,)
    }


def lstm4ot_decoder_fused(y_emb_seq, y_mask_seq, hc0, context, x_mask, kp):
    """Run the decoder recurrence for T steps in ONE pallas_call (grid=(T,)).

    T=1 is exactly the is_predicting=True forward (single recurrence step);
    T>1 is the teacher-forced loop with weights/context resident in VMEM and
    the (h, c) state carried in VMEM scratch across steps.
    """
    T = y_emb_seq.shape[0]
    # Decode-step-invariant attention pre-projection, once per source sequence,
    # exactly as in the PyTorch forward: pctx = F.linear(context, Wc_att, b_att).
    pctx = jnp.einsum("sbc,dc->sbd", context, kp["wc_att"]) + kp["b_att"]
    # Additive attention-mask bias (0 valid / -1e9 masked): replaces the two
    # x_mask multiplies; identical softmax for any not-fully-masked row.
    att_bias = (x_mask - 1.0) * 1e9

    def const2(shape):
        return pl.BlockSpec(shape, lambda t: (0, 0))

    def const3(shape):
        return pl.BlockSpec(shape, lambda t: (0, 0, 0))

    def step3(shape):
        return pl.BlockSpec((None,) + shape, lambda t: (t, 0, 0))

    in_specs = [
        step3((B, I)),                    # y_emb_seq  (T, B, I)
        step3((B, 1)),                    # y_mask_seq (T, B, 1)
        const2((B, 2 * H)),               # hc0
        const3((S, B, C)),                # context
        const3((S, B, C)),                # pctx
        const3((S, B, 1)),                # att_bias
        const2((I + H, 4 * H)),           # w_gate  (bf16)
        const2((1, 4 * H)),               # b_gate
        const2((H + C, 4 * H)),           # w_ifoc  (bf16)
        const2((1, 4 * H)),               # bx
        const2((2 * H, C)),               # w_comb  (bf16)
        const2((1, C)),                   # u_att
        const2((H + C + I, V)),           # w_proj  (bf16)
        const2((1, V)),                   # b_proj
    ]
    out_specs = (
        pl.BlockSpec((None, B, V), lambda t: (t, 0, 0)),   # per-step y_pred
        pl.BlockSpec((B, 2 * H), lambda t: (0, 0)),        # final packed [h | c]
    )
    out_shape = (
        jax.ShapeDtypeStruct((T, B, V), jnp.float32),
        jax.ShapeDtypeStruct((B, 2 * H), jnp.float32),
    )
    # TODO(synk): add a leading "parallel" grid axis over independent beams to
    # use the second TensorCore on v7x.
    y_pred, hc = pl.pallas_call(
        lstm4ot_decoder_kernel,
        out_shape=out_shape,
        grid=(T,),
        in_specs=in_specs,
        out_specs=out_specs,
        scratch_shapes=(pltpu.VMEM((B, 2 * H), jnp.float32),),
        compiler_params=pltpu.CompilerParams(dimension_semantics=("arbitrary",)),
    )(y_emb_seq, y_mask_seq, hc0, context, pctx, att_bias,
      kp["w_gate"], kp["b_gate"], kp["w_ifoc"], kp["bx"],
      kp["w_comb"], kp["u_att"], kp["w_proj"], kp["b_proj"])
    return y_pred, hc


# ------------------- deterministic parameter construction -------------------
def init_params(key):
    ks = jax.random.split(key, 13)

    def w(k, shape, s=0.1):
        return s * jax.random.normal(k, shape, jnp.float32)

    # PyTorch parameter shapes (as in the module).
    return {
        "w_ih": w(ks[0], (4 * H, I)),
        "w_hh": w(ks[1], (4 * H, H)),
        "b_ih": w(ks[2], (4 * H,), 0.05),
        "b_hh": w(ks[3], (4 * H,), 0.05),
        "wx": w(ks[4], (4 * H, C)),
        "ux": w(ks[5], (4 * H, H)),
        "bx": w(ks[6], (4 * H,), 0.05),
        "wc_att": w(ks[7], (C, C)),
        "b_att": w(ks[8], (C,), 0.05),
        "w_comb_att": w(ks[9], (C, 2 * H)),
        "u_att": w(ks[10], (1, C)),
        "w_proj": w(ks[11], (V, H + C + I)),
        "b_proj": w(ks[12], (V,), 0.05),
    }


# ---------------------------- pure-JAX reference ----------------------------
def reference_step(y_emb, y_mask, h0, c0, context, x_mask, p):
    gates = y_emb @ p["w_ih"].T + p["b_ih"] + h0 @ p["w_hh"].T + p["b_hh"]
    i_g = jax.nn.sigmoid(gates[:, :H])
    f_g = jax.nn.sigmoid(gates[:, H:2 * H])
    g_g = jnp.tanh(gates[:, 2 * H:3 * H])
    o_g = jax.nn.sigmoid(gates[:, 3 * H:])
    c1 = f_g * c0 + i_g * g_g
    h1 = o_g * jnp.tanh(c1)
    h1 = y_mask * h1 + (1.0 - y_mask) * h0
    c1 = y_mask * c1 + (1.0 - y_mask) * c0

    s = jnp.concatenate([h1, c1], axis=1)
    pctx = jnp.einsum("sbc,dc->sbd", context, p["wc_att"]) + p["b_att"]
    h_comb = s @ p["w_comb_att"].T
    unreg = jnp.tanh(pctx + h_comb[None]) * x_mask
    unreg_att = jnp.einsum("sbc,c->sb", unreg, p["u_att"][0])[..., None]     # (S, B, 1)
    word_atten = jnp.exp(unreg_att - jnp.max(unreg_att, axis=0, keepdims=True)) * x_mask
    word_atten = word_atten / jnp.sum(word_atten, axis=0, keepdims=True)
    atted = jnp.sum(word_atten * context, axis=0)                           # (B, C)

    ifoc = h1 @ p["ux"].T + atted @ p["wx"].T + p["bx"]
    i2 = jax.nn.sigmoid(ifoc[:, :H])
    f2 = jax.nn.sigmoid(ifoc[:, H:2 * H])
    o2 = jax.nn.sigmoid(ifoc[:, 2 * H:3 * H])
    c2 = f2 * c1 + i2 * jnp.tanh(ifoc[:, 3 * H:])
    h2 = o2 * jnp.tanh(c2)
    c2 = y_mask * c2 + (1.0 - y_mask) * c1
    h2 = y_mask * h2 + (1.0 - y_mask) * h1

    feat = jnp.concatenate([h2, atted, y_emb], axis=1)
    y_pred = jax.nn.softmax(feat @ p["w_proj"].T + p["b_proj"], axis=-1)
    return y_pred, h2, c2


if __name__ == "__main__":
    key = jax.random.PRNGKey(0)
    kw, k1, k2, k3, k4 = jax.random.split(key, 5)
    params = init_params(kw)
    kparams = prepare_kernel_params(params)   # one-time weight fusion / permute / bf16 cast

    T = 8
    y_emb_seq = jax.random.normal(k1, (T, B, I), jnp.float32)
    h0 = 0.5 * jax.random.normal(k2, (B, H), jnp.float32)
    c0 = 0.5 * jax.random.normal(k3, (B, H), jnp.float32)
    context = jax.random.normal(k4, (S, B, C), jnp.float32)

    src_lens = jnp.array([16, 12, 9, 5, 16, 14, 7, 11], jnp.int32)
    x_mask = (jnp.arange(S)[:, None] < src_lens[None, :]).astype(jnp.float32)[..., None]   # (S,B,1)
    tgt_lens = jnp.array([8, 7, 8, 5, 3, 8, 6, 2], jnp.int32)
    y_mask_seq = (jnp.arange(T)[:, None] < tgt_lens[None, :]).astype(jnp.float32)[..., None]  # (T,B,1)

    hc0 = jnp.concatenate([h0, c0], axis=1)   # packed state, stays packed end-to-end

    # is_predicting=True forward (exactly one recurrence step): T=1 call.
    y_pred_1, hc_1 = lstm4ot_decoder_fused(
        y_emb_seq[:1], y_mask_seq[:1], hc0, context, x_mask, kparams)
    # Fused teacher-forced recurrence: all T steps in one pallas_call.
    y_pred_all, hc_T = lstm4ot_decoder_fused(
        y_emb_seq, y_mask_seq, hc0, context, x_mask, kparams)
    jax.block_until_ready((y_pred_1, hc_1, y_pred_all, hc_T))

    # step-by-step pure-JAX f32 reference
    h, c = h0, c0
    ref_preds, ref_h, ref_c = [], [], []
    for t in range(T):
        yp, h, c = reference_step(y_emb_seq[t], y_mask_seq[t], h, c, context, x_mask, params)
        ref_preds.append(yp)
        ref_h.append(h)
        ref_c.append(c)
    ref_preds = jnp.stack(ref_preds)

    tol = dict(rtol=5e-2, atol=5e-2)   # bf16 matmuls, error compounds over 8 carried steps
    assert jnp.allclose(y_pred_1[0], ref_preds[0], **tol), "predicting y_pred mismatch"
    assert jnp.allclose(hc_1[:, :H], ref_h[0], **tol), "predicting h mismatch"
    assert jnp.allclose(hc_1[:, H:], ref_c[0], **tol), "predicting c mismatch"
    assert jnp.allclose(y_pred_all, ref_preds, **tol), "fused y_pred mismatch"
    assert jnp.allclose(hc_T[:, :H], ref_h[-1], **tol), "fused final h mismatch"
    assert jnp.allclose(hc_T[:, H:], ref_c[-1], **tol), "fused final c mismatch"

    print("KERNEL_OK")
</pallas_src>

<mosaic_0001>
module attributes {stable_mosaic.version = 11 : i64} {
  func.func @lstm4ot_decoder_kernel(%arg0: i32, %arg1: memref<1x8x32xf32, #tpu.memory_space<vmem>>, %arg2: memref<1x8x1xf32, #tpu.memory_space<vmem>>, %arg3: memref<8x64xf32, #tpu.memory_space<vmem>>, %arg4: memref<16x8x64xf32, #tpu.memory_space<vmem>>, %arg5: memref<16x8x64xf32, #tpu.memory_space<vmem>>, %arg6: memref<16x8x1xf32, #tpu.memory_space<vmem>>, %arg7: memref<64x128xbf16, #tpu.memory_space<vmem>>, %arg8: memref<1x128xf32, #tpu.memory_space<vmem>>, %arg9: memref<96x128xbf16, #tpu.memory_space<vmem>>, %arg10: memref<1x128xf32, #tpu.memory_space<vmem>>, %arg11: memref<64x64xbf16, #tpu.memory_space<vmem>>, %arg12: memref<1x64xf32, #tpu.memory_space<vmem>>, %arg13: memref<128x128xbf16, #tpu.memory_space<vmem>>, %arg14: memref<1x128xf32, #tpu.memory_space<vmem>>, %arg15: memref<1x8x128xf32, #tpu.memory_space<vmem>>, %arg16: memref<8x64xf32, #tpu.memory_space<vmem>>, %arg17: memref<8x64xf32, #tpu.memory_space<vmem>>) attributes {dimension_semantics = [#tpu.dimension_semantics<arbitrary>], iteration_bounds = array<i64: 1>, scalar_prefetch = 0 : i64, scratch_operands = 1 : i64, tpu.core_type = #tpu.core_type<tc>, window_params = [{transform_indices = @transform_0, window_bounds = array<i64: 1, 8, 32>}, {transform_indices = @transform_1, window_bounds = array<i64: 1, 8, 1>}, {pipeline_mode = #tpu.pipeline_mode<synchronous>, transform_indices = @transform_2, window_bounds = array<i64: 8, 64>}, {pipeline_mode = #tpu.pipeline_mode<synchronous>, transform_indices = @transform_3, window_bounds = array<i64: 16, 8, 64>}, {pipeline_mode = #tpu.pipeline_mode<synchronous>, transform_indices = @transform_4, window_bounds = array<i64: 16, 8, 64>}, {pipeline_mode = #tpu.pipeline_mode<synchronous>, transform_indices = @transform_5, window_bounds = array<i64: 16, 8, 1>}, {pipeline_mode = #tpu.pipeline_mode<synchronous>, transform_indices = @transform_6, window_bounds = array<i64: 64, 128>}, {pipeline_mode = #tpu.pipeline_mode<synchronous>, transform_indices = @transform_7, window_bounds = array<i64: 1, 128>}, {pipeline_mode = #tpu.pipeline_mode<synchronous>, transform_indices = @transform_8, window_bounds = array<i64: 96, 128>}, {pipeline_mode = #tpu.pipeline_mode<synchronous>, transform_indices = @transform_9, window_bounds = array<i64: 1, 128>}, {pipeline_mode = #tpu.pipeline_mode<synchronous>, transform_indices = @transform_10, window_bounds = array<i64: 64, 64>}, {pipeline_mode = #tpu.pipeline_mode<synchronous>, transform_indices = @transform_11, window_bounds = array<i64: 1, 64>}, {pipeline_mode = #tpu.pipeline_mode<synchronous>, transform_indices = @transform_12, window_bounds = array<i64: 128, 128>}, {pipeline_mode = #tpu.pipeline_mode<synchronous>, transform_indices = @transform_13, window_bounds = array<i64: 1, 128>}, {transform_indices = @transform_14, window_bounds = array<i64: 1, 8, 128>}, {pipeline_mode = #tpu.pipeline_mode<synchronous>, transform_indices = @transform_15, window_bounds = array<i64: 8, 64>}]} {
    %c0_i32 = arith.constant 0 : i32
    %0 = arith.cmpi eq, %arg0, %c0_i32 : i32
    %1 = arith.extui %0 : i1 to i32
    %c0_i32_0 = arith.constant 0 : i32
    %2 = arith.cmpi ne, %1, %c0_i32_0 : i32
    scf.if %2 {
      %c0_59 = arith.constant 0 : index
      %c0_60 = arith.constant 0 : index
      %141 = vector.load %arg3[%c0_59, %c0_60] : memref<8x64xf32, #tpu.memory_space<vmem>>, vector<8x64xf32>
      %c0_61 = arith.constant 0 : index
      %c0_62 = arith.constant 0 : index
      %142 = vector.load %arg17[%c0_61, %c0_62] : memref<8x64xf32, #tpu.memory_space<vmem>>, vector<8x64xf32>
      tpu.vector_store %arg17[%c0_61, %c0_62], %141 {strides = array<i32>} : memref<8x64xf32, #tpu.memory_space<vmem>>, vector<8x64xf32>,
    } else {
    }
    %c0 = arith.constant 0 : index
    %c0_1 = arith.constant 0 : index
    %c0_2 = arith.constant 0 : index
    %3 = vector.load %arg1[%c0, %c0_1, %c0_2] : memref<1x8x32xf32, #tpu.memory_space<vmem>>, vector<1x8x32xf32>
    %4 = vector.shape_cast %3 : vector<1x8x32xf32> to vector<8x32xf32>
    %c0_3 = arith.constant 0 : index
    %c0_4 = arith.constant 0 : index
    %c0_5 = arith.constant 0 : index
    %5 = vector.load %arg2[%c0_3, %c0_4, %c0_5] : memref<1x8x1xf32, #tpu.memory_space<vmem>>, vector<1x8x1xf32>
    %6 = vector.shape_cast %5 : vector<1x8x1xf32> to vector<8x1xf32>
    %c0_6 = arith.constant 0 : index
    %c0_7 = arith.constant 0 : index
    %7 = vector.load %arg17[%c0_6, %c0_7] : memref<8x64xf32, #tpu.memory_space<vmem>>, vector<8x64xf32>
    %8 = vector.extract_strided_slice %7 {offsets = [0, 0], sizes = [8, 32], strides = [1, 1]} : vector<8x64xf32> to vector<8x32xf32>
    %9 = vector.extract_strided_slice %7 {offsets = [0, 32], sizes = [8, 32], strides = [1, 1]} : vector<8x64xf32> to vector<8x32xf32>
    %10 = tpu.concatenate %4, %8 in 1 : vector<8x32xf32>, vector<8x32xf32> -> vector<8x64xf32>
    %11 = arith.truncf %10 : vector<8x64xf32> to vector<8x64xbf16>
    %c0_8 = arith.constant 0 : index
    %c0_9 = arith.constant 0 : index
    %12 = vector.load %arg7[%c0_8, %c0_9] : memref<64x128xbf16, #tpu.memory_space<vmem>>, vector<64x128xbf16>
    %cst = arith.constant dense<0.000000e+00> : vector<8x128xf32>
    %13 = tpu.matmul %11, %12, %cst {dimension_numbers = #tpu.dot_dimension_numbers<[1], [0], [0], [1], [0, 0, 1, 1], [], []>} : vector<8x64xbf16>, vector<64x128xbf16>, vector<8x128xf32> -> vector<8x128xf32>
    %c0_10 = arith.constant 0 : index
    %c0_11 = arith.constant 0 : index
    %14 = vector.load %arg8[%c0_10, %c0_11] : memref<1x128xf32, #tpu.memory_space<vmem>>, vector<1x128xf32>
    %15 = vector.broadcast %14 : vector<1x128xf32> to vector<8x128xf32>
    %16 = arith.addf %13, %15 : vector<8x128xf32>
    %17 = vector.extract_strided_slice %16 {offsets = [0, 0], sizes = [8, 96], strides = [1, 1]} : vector<8x128xf32> to vector<8x96xf32>
    %cst_12 = arith.constant 5.000000e-01 : f32
    %18 = vector.broadcast %cst_12 : f32 to vector<8x96xf32>
    %19 = arith.mulf %18, %17 : vector<8x96xf32>
    %20 = math.tanh %19 : vector<8x96xf32>
    %cst_13 = arith.constant 1.000000e+00 : f32
    %21 = vector.broadcast %cst_13 : f32 to vector<8x96xf32>
    %22 = arith.addf %20, %21 : vector<8x96xf32>
    %cst_14 = arith.constant 5.000000e-01 : f32
    %23 = vector.broadcast %cst_14 : f32 to vector<8x96xf32>
    %24 = arith.mulf %23, %22 : vector<8x96xf32>
    %25 = vector.extract_strided_slice %24 {offsets = [0, 0], sizes = [8, 32], strides = [1, 1]} : vector<8x96xf32> to vector<8x32xf32>
    %26 = vector.extract_strided_slice %24 {offsets = [0, 32], sizes = [8, 32], strides = [1, 1]} : vector<8x96xf32> to vector<8x32xf32>
    %27 = vector.extract_strided_slice %24 {offsets = [0, 64], sizes = [8, 32], strides = [1, 1]} : vector<8x96xf32> to vector<8x32xf32>
    %28 = vector.extract_strided_slice %16 {offsets = [0, 96], sizes = [8, 32], strides = [1, 1]} : vector<8x128xf32> to vector<8x32xf32>
    %29 = math.tanh %28 : vector<8x32xf32>
    %30 = arith.mulf %26, %9 : vector<8x32xf32>
    %31 = arith.mulf %25, %29 : vector<8x32xf32>
    %32 = arith.addf %30, %31 : vector<8x32xf32>
    %33 = math.tanh %32 : vector<8x32xf32>
    %34 = arith.mulf %27, %33 : vector<8x32xf32>
    %35 = vector.broadcast %6 : vector<8x1xf32> to vector<8x32xf32>
    %36 = arith.mulf %35, %34 : vector<8x32xf32>
    %cst_15 = arith.constant 1.000000e+00 : f32
    %37 = vector.broadcast %cst_15 : f32 to vector<8x1xf32>
    %38 = arith.subf %37, %6 : vector<8x1xf32>
    %39 = vector.broadcast %38 : vector<8x1xf32> to vector<8x32xf32>
    %40 = arith.mulf %39, %8 : vector<8x32xf32>
    %41 = arith.addf %36, %40 : vector<8x32xf32>
    %42 = vector.broadcast %6 : vector<8x1xf32> to vector<8x32xf32>
    %43 = arith.mulf %42, %32 : vector<8x32xf32>
    %cst_16 = arith.constant 1.000000e+00 : f32
    %44 = vector.broadcast %cst_16 : f32 to vector<8x1xf32>
    %45 = arith.subf %44, %6 : vector<8x1xf32>
    %46 = vector.broadcast %45 : vector<8x1xf32> to vector<8x32xf32>
    %47 = arith.mulf %46, %9 : vector<8x32xf32>
    %48 = arith.addf %43, %47 : vector<8x32xf32>
    %49 = tpu.concatenate %41, %48 in 1 : vector<8x32xf32>, vector<8x32xf32> -> vector<8x64xf32>
    %50 = arith.truncf %49 : vector<8x64xf32> to vector<8x64xbf16>
    %c0_17 = arith.constant 0 : index
    %c0_18 = arith.constant 0 : index
    %51 = vector.load %arg11[%c0_17, %c0_18] : memref<64x64xbf16, #tpu.memory_space<vmem>>, vector<64x64xbf16>
    %cst_19 = arith.constant dense<0.000000e+00> : vector<8x64xf32>
    %52 = tpu.matmul %50, %51, %cst_19 {dimension_numbers = #tpu.dot_dimension_numbers<[1], [0], [0], [1], [0, 0, 1, 1], [], []>} : vector<8x64xbf16>, vector<64x64xbf16>, vector<8x64xf32> -> vector<8x64xf32>
    %c0_20 = arith.constant 0 : index
    %c0_21 = arith.constant 0 : index
    %c0_22 = arith.constant 0 : index
    %53 = vector.load %arg5[%c0_20, %c0_21, %c0_22] : memref<16x8x64xf32, #tpu.memory_space<vmem>>, vector<16x8x64xf32>
    %54 = vector.shape_cast %52 : vector<8x64xf32> to vector<1x8x64xf32>
    %55 = vector.broadcast %54 : vector<1x8x64xf32> to vector<16x8x64xf32>
    %56 = arith.addf %53, %55 : vector<16x8x64xf32>
    %57 = math.tanh %56 : vector<16x8x64xf32>
    %c0_23 = arith.constant 0 : index
    %c0_24 = arith.constant 0 : index
    %58 = vector.load %arg12[%c0_23, %c0_24] : memref<1x64xf32, #tpu.memory_space<vmem>>, vector<1x64xf32>
    %59 = vector.shape_cast %58 : vector<1x64xf32> to vector<1x1x64xf32>
    %60 = vector.broadcast %59 : vector<1x1x64xf32> to vector<16x8x64xf32>
    %61 = arith.mulf %57, %60 : vector<16x8x64xf32>
    %cst_25 = arith.constant dense<0.000000e+00> : vector<16x8xf32>
    %62 = vector.multi_reduction <add>, %61, %cst_25 [2] : vector<16x8x64xf32> to vector<16x8xf32>
    %63 = vector.shape_cast %62 : vector<16x8xf32> to vector<16x8x1xf32>
    %c0_26 = arith.constant 0 : index
    %c0_27 = arith.constant 0 : index
    %c0_28 = arith.constant 0 : index
    %64 = vector.load %arg6[%c0_26, %c0_27, %c0_28] : memref<16x8x1xf32, #tpu.memory_space<vmem>>, vector<16x8x1xf32>
    %65 = arith.addf %63, %64 : vector<16x8x1xf32>
    %cst_29 = arith.constant dense<0xFF800000> : vector<8x1xf32>
    %66 = vector.multi_reduction <maximumf>, %65, %cst_29 [0] : vector<16x8x1xf32> to vector<8x1xf32>
    %67 = vector.shape_cast %66 : vector<8x1xf32> to vector<1x8x1xf32>
    %68 = vector.broadcast %67 : vector<1x8x1xf32> to vector<16x8x1xf32>
    %69 = arith.subf %65, %68 : vector<16x8x1xf32>
    %70 = math.exp %69 : vector<16x8x1xf32>
    %cst_30 = arith.constant dense<0.000000e+00> : vector<8x1xf32>
    %71 = vector.multi_reduction <add>, %70, %cst_30 [0] : vector<16x8x1xf32> to vector<8x1xf32>
    %72 = vector.shape_cast %71 : vector<8x1xf32> to vector<1x8x1xf32>
    %73 = tpu.reciprocal %72 {approx = true} : vector<1x8x1xf32> -> vector<1x8x1xf32>
    %74 = vector.broadcast %73 : vector<1x8x1xf32> to vector<16x8x1xf32>
    %75 = arith.mulf %70, %74 : vector<16x8x1xf32>
    %c0_31 = arith.constant 0 : index
    %c0_32 = arith.constant 0 : index
    %c0_33 = arith.constant 0 : index
    %76 = vector.load %arg4[%c0_31, %c0_32, %c0_33] : memref<16x8x64xf32, #tpu.memory_space<vmem>>, vector<16x8x64xf32>
    %77 = vector.broadcast %75 : vector<16x8x1xf32> to vector<16x8x64xf32>
    %78 = arith.mulf %77, %76 : vector<16x8x64xf32>
    %cst_34 = arith.constant dense<0.000000e+00> : vector<8x64xf32>
    %79 = vector.multi_reduction <add>, %78, %cst_34 [0] : vector<16x8x64xf32> to vector<8x64xf32>
    %80 = tpu.concatenate %41, %79 in 1 : vector<8x32xf32>, vector<8x64xf32> -> vector<8x96xf32>
    %81 = arith.truncf %80 : vector<8x96xf32> to vector<8x96xbf16>
    %c0_35 = arith.constant 0 : index
    %c0_36 = arith.constant 0 : index
    %82 = vector.load %arg9[%c0_35, %c0_36] : memref<96x128xbf16, #tpu.memory_space<vmem>>, vector<96x128xbf16>
    %cst_37 = arith.constant dense<0.000000e+00> : vector<8x128xf32>
    %83 = tpu.matmul %81, %82, %cst_37 {dimension_numbers = #tpu.dot_dimension_numbers<[1], [0], [0], [1], [0, 0, 1, 1], [], []>} : vector<8x96xbf16>, vector<96x128xbf16>, vector<8x128xf32> -> vector<8x128xf32>
    %c0_38 = arith.constant 0 : index
    %c0_39 = arith.constant 0 : index
    %84 = vector.load %arg10[%c0_38, %c0_39] : memref<1x128xf32, #tpu.memory_space<vmem>>, vector<1x128xf32>
    %85 = vector.broadcast %84 : vector<1x128xf32> to vector<8x128xf32>
    %86 = arith.addf %83, %85 : vector<8x128xf32>
    %87 = vector.extract_strided_slice %86 {offsets = [0, 0], sizes = [8, 96], strides = [1, 1]} : vector<8x128xf32> to vector<8x96xf32>
    %cst_40 = arith.constant 5.000000e-01 : f32
    %88 = vector.broadcast %cst_40 : f32 to vector<8x96xf32>
    %89 = arith.mulf %88, %87 : vector<8x96xf32>
    %90 = math.tanh %89 : vector<8x96xf32>
    %cst_41 = arith.constant 1.000000e+00 : f32
    %91 = vector.broadcast %cst_41 : f32 to vector<8x96xf32>
    %92 = arith.addf %90, %91 : vector<8x96xf32>
    %cst_42 = arith.constant 5.000000e-01 : f32
    %93 = vector.broadcast %cst_42 : f32 to vector<8x96xf32>
    %94 = arith.mulf %93, %92 : vector<8x96xf32>
    %95 = vector.extract_strided_slice %94 {offsets = [0, 0], sizes = [8, 32], strides = [1, 1]} : vector<8x96xf32> to vector<8x32xf32>
    %96 = vector.extract_strided_slice %94 {offsets = [0, 32], sizes = [8, 32], strides = [1, 1]} : vector<8x96xf32> to vector<8x32xf32>
    %97 = vector.extract_strided_slice %94 {offsets = [0, 64], sizes = [8, 32], strides = [1, 1]} : vector<8x96xf32> to vector<8x32xf32>
    %98 = arith.mulf %96, %48 : vector<8x32xf32>
    %99 = vector.extract_strided_slice %86 {offsets = [0, 96], sizes = [8, 32], strides = [1, 1]} : vector<8x128xf32> to vector<8x32xf32>
    %100 = math.tanh %99 : vector<8x32xf32>
    %101 = arith.mulf %95, %100 : vector<8x32xf32>
    %102 = arith.addf %98, %101 : vector<8x32xf32>
    %103 = math.tanh %102 : vector<8x32xf32>
    %104 = arith.mulf %97, %103 : vector<8x32xf32>
    %105 = vector.broadcast %6 : vector<8x1xf32> to vector<8x32xf32>
    %106 = arith.mulf %105, %102 : vector<8x32xf32>
    %cst_43 = arith.constant 1.000000e+00 : f32
    %107 = vector.broadcast %cst_43 : f32 to vector<8x1xf32>
    %108 = arith.subf %107, %6 : vector<8x1xf32>
    %109 = vector.broadcast %108 : vector<8x1xf32> to vector<8x32xf32>
    %110 = arith.mulf %109, %48 : vector<8x32xf32>
    %111 = arith.addf %106, %110 : vector<8x32xf32>
    %112 = vector.broadcast %6 : vector<8x1xf32> to vector<8x32xf32>
    %113 = arith.mulf %112, %104 : vector<8x32xf32>
    %cst_44 = arith.constant 1.000000e+00 : f32
    %114 = vector.broadcast %cst_44 : f32 to vector<8x1xf32>
    %115 = arith.subf %114, %6 : vector<8x1xf32>
    %116 = vector.broadcast %115 : vector<8x1xf32> to vector<8x32xf32>
    %117 = arith.mulf %116, %41 : vector<8x32xf32>
    %118 = arith.addf %113, %117 : vector<8x32xf32>
    %119 = tpu.concatenate %118, %79, %4 in 1 : vector<8x32xf32>, vector<8x64xf32>, vector<8x32xf32> -> vector<8x128xf32>
    %120 = arith.truncf %119 : vector<8x128xf32> to vector<8x128xbf16>
    %c0_45 = arith.constant 0 : index
    %c0_46 = arith.constant 0 : index
    %121 = vector.load %arg13[%c0_45, %c0_46] : memref<128x128xbf16, #tpu.memory_space<vmem>>, vector<128x128xbf16>
    %cst_47 = arith.constant dense<0.000000e+00> : vector<8x128xf32>
    %122 = tpu.matmul %120, %121, %cst_47 {dimension_numbers = #tpu.dot_dimension_numbers<[1], [0], [0], [1], [0, 0, 1, 1], [], []>} : vector<8x128xbf16>, vector<128x128xbf16>, vector<8x128xf32> -> vector<8x128xf32>
    %c0_48 = arith.constant 0 : index
    %c0_49 = arith.constant 0 : index
    %123 = vector.load %arg14[%c0_48, %c0_49] : memref<1x128xf32, #tpu.memory_space<vmem>>, vector<1x128xf32>
    %124 = vector.broadcast %123 : vector<1x128xf32> to vector<8x128xf32>
    %125 = arith.addf %122, %124 : vector<8x128xf32>
    %cst_50 = arith.constant dense<0xFF800000> : vector<8xf32>
    %126 = vector.multi_reduction <maximumf>, %125, %cst_50 [1] : vector<8x128xf32> to vector<8xf32>
    %127 = vector.shape_cast %126 : vector<8xf32> to vector<8x1xf32>
    %128 = vector.broadcast %127 : vector<8x1xf32> to vector<8x128xf32>
    %129 = arith.subf %125, %128 : vector<8x128xf32>
    %130 = math.exp %129 : vector<8x128xf32>
    %cst_51 = arith.constant dense<0.000000e+00> : vector<8xf32>
    %131 = vector.multi_reduction <add>, %130, %cst_51 [1] : vector<8x128xf32> to vector<8xf32>
    %132 = vector.shape_cast %131 : vector<8xf32> to vector<8x1xf32>
    %133 = vector.broadcast %132 : vector<8x1xf32> to vector<8x128xf32>
    %134 = arith.divf %130, %133 : vector<8x128xf32>
    %c0_52 = arith.constant 0 : index
    %c0_53 = arith.constant 0 : index
    %c0_54 = arith.constant 0 : index
    %135 = vector.load %arg15[%c0_52, %c0_53, %c0_54] : memref<1x8x128xf32, #tpu.memory_space<vmem>>, vector<1x8x128xf32>
    %136 = vector.shape_cast %135 : vector<1x8x128xf32> to vector<8x128xf32>
    %137 = vector.shape_cast %134 : vector<8x128xf32> to vector<1x8x128xf32>
    tpu.vector_store %arg15[%c0_52, %c0_53, %c0_54], %137 {strides = array<i32>} : memref<1x8x128xf32, #tpu.memory_space<vmem>>, vector<1x8x128xf32>,
    %138 = tpu.concatenate %118, %111 in 1 : vector<8x32xf32>, vector<8x32xf32> -> vector<8x64xf32>
    %c0_55 = arith.constant 0 : index
    %c0_56 = arith.constant 0 : index
    %139 = vector.load %arg17[%c0_55, %c0_56] : memref<8x64xf32, #tpu.memory_space<vmem>>, vector<8x64xf32>
    tpu.vector_store %arg17[%c0_55, %c0_56], %138 {strides = array<i32>} : memref<8x64xf32, #tpu.memory_space<vmem>>, vector<8x64xf32>,
    %c0_57 = arith.constant 0 : index
    %c0_58 = arith.constant 0 : index
    %140 = vector.load %arg16[%c0_57, %c0_58] : memref<8x64xf32, #tpu.memory_space<vmem>>, vector<8x64xf32>
    tpu.vector_store %arg16[%c0_57, %c0_58], %138 {strides = array<i32>} : memref<8x64xf32, #tpu.memory_space<vmem>>, vector<8x64xf32>,
    return
  }
  func.func @transform_0(%arg0: i32) -> (i32, i32, i32) {
    %c0_i32 = arith.constant 0 : i32
    %c0_i32_0 = arith.constant 0 : i32
    %c0_i32_1 = arith.constant 0 : i32
    return %arg0, %c0_i32, %c0_i32_0 : i32, i32, i32
  }
  func.func @transform_1(%arg0: i32) -> (i32, i32, i32) {
    %c0_i32 = arith.constant 0 : i32
    %c0_i32_0 = arith.constant 0 : i32
    %c0_i32_1 = arith.constant 0 : i32
    return %arg0, %c0_i32, %c0_i32_0 : i32, i32, i32
  }
  func.func @transform_2(%arg0: i32) -> (i32, i32) {
    %c0_i32 = arith.constant 0 : i32
    %c0_i32_0 = arith.constant 0 : i32
    %c0_i32_1 = arith.constant 0 : i32
    return %c0_i32, %c0_i32_0 : i32, i32
  }
  func.func @transform_3(%arg0: i32) -> (i32, i32, i32) {
    %c0_i32 = arith.constant 0 : i32
    %c0_i32_0 = arith.constant 0 : i32
    %c0_i32_1 = arith.constant 0 : i32
    %c0_i32_2 = arith.constant 0 : i32
    return %c0_i32, %c0_i32_0, %c0_i32_1 : i32, i32, i32
  }
  func.func @transform_4(%arg0: i32) -> (i32, i32, i32) {
    %c0_i32 = arith.constant 0 : i32
    %c0_i32_0 = arith.constant 0 : i32
    %c0_i32_1 = arith.constant 0 : i32
    %c0_i32_2 = arith.constant 0 : i32
    return %c0_i32, %c0_i32_0, %c0_i32_1 : i32, i32, i32
  }
  func.func @transform_5(%arg0: i32) -> (i32, i32, i32) {
    %c0_i32 = arith.constant 0 : i32
    %c0_i32_0 = arith.constant 0 : i32
    %c0_i32_1 = arith.constant 0 : i32
    %c0_i32_2 = arith.constant 0 : i32
    return %c0_i32, %c0_i32_0, %c0_i32_1 : i32, i32, i32
  }
  func.func @transform_6(%arg0: i32) -> (i32, i32) {
    %c0_i32 = arith.constant 0 : i32
    %c0_i32_0 = arith.constant 0 : i32
    %c0_i32_1 = arith.constant 0 : i32
    return %c0_i32, %c0_i32_0 : i32, i32
  }
  func.func @transform_7(%arg0: i32) -> (i32, i32) {
    %c0_i32 = arith.constant 0 : i32
    %c0_i32_0 = arith.constant 0 : i32
    %c0_i32_1 = arith.constant 0 : i32
    return %c0_i32, %c0_i32_0 : i32, i32
  }
  func.func @transform_8(%arg0: i32) -> (i32, i32) {
    %c0_i32 = arith.constant 0 : i32
    %c0_i32_0 = arith.constant 0 : i32
    %c0_i32_1 = arith.constant 0 : i32
    return %c0_i32, %c0_i32_0 : i32, i32
  }
  func.func @transform_9(%arg0: i32) -> (i32, i32) {
    %c0_i32 = arith.constant 0 : i32
    %c0_i32_0 = arith.constant 0 : i32
    %c0_i32_1 = arith.constant 0 : i32
    return %c0_i32, %c0_i32_0 : i32, i32
  }
  func.func @transform_10(%arg0: i32) -> (i32, i32) {
    %c0_i32 = arith.constant 0 : i32
    %c0_i32_0 = arith.constant 0 : i32
    %c0_i32_1 = arith.constant 0 : i32
    return %c0_i32, %c0_i32_0 : i32, i32
  }
  func.func @transform_11(%arg0: i32) -> (i32, i32) {
    %c0_i32 = arith.constant 0 : i32
    %c0_i32_0 = arith.constant 0 : i32
    %c0_i32_1 = arith.constant 0 : i32
    return %c0_i32, %c0_i32_0 : i32, i32
  }
  func.func @transform_12(%arg0: i32) -> (i32, i32) {
    %c0_i32 = arith.constant 0 : i32
    %c0_i32_0 = arith.constant 0 : i32
    %c0_i32_1 = arith.constant 0 : i32
    return %c0_i32, %c0_i32_0 : i32, i32
  }
  func.func @transform_13(%arg0: i32) -> (i32, i32) {
    %c0_i32 = arith.constant 0 : i32
    %c0_i32_0 = arith.constant 0 : i32
    %c0_i32_1 = arith.constant 0 : i32
    return %c0_i32, %c0_i32_0 : i32, i32
  }
  func.func @transform_14(%arg0: i32) -> (i32, i32, i32) {
    %c0_i32 = arith.constant 0 : i32
    %c0_i32_0 = arith.constant 0 : i32
    %c0_i32_1 = arith.constant 0 : i32
    return %arg0, %c0_i32, %c0_i32_0 : i32, i32, i32
  }
  func.func @transform_15(%arg0: i32) -> (i32, i32) {
    %c0_i32 = arith.constant 0 : i32
    %c0_i32_0 = arith.constant 0 : i32
    %c0_i32_1 = arith.constant 0 : i32
    return %c0_i32, %c0_i32_0 : i32, i32
  }
}

</mosaic_0001>

<llo_original>
// kernel: tpu_custom_call.1
$region0: #{tpu_custom_call.1}
  #allocation0 [shape = 'u32[]', space=smem, size = 0x4, offset = 0x4, fixed_abs, tag = 'smem constant byte address 0x4 - core index']
  #allocation1 [shape = 'u32[144,128]{1,0:T(1,128)}', space=vmem, size = 0x12000, scoped, tag = 'internal scratch']
  #allocation2 [shape = 'f32[8,64]{1,0:T(8,128)}', space=vmem, size = 0x1000, scoped, tag = 'scratch operand']
  %s0 = inlined_call_operand.hbm [shape: f32[1,8,32], index: 0, kind: input, shape index: {}]
  %s1 = inlined_call_operand.vmem [shape: f32[1,8,1], index: 1, kind: input, shape index: {}]
  %s2 = inlined_call_operand.hbm [shape: f32[8,64], index: 2, kind: input, shape index: {}]
  %s3 = inlined_call_operand.vmem [shape: f32[16,8,64], index: 3, kind: input, shape index: {}]
  %s4 = inlined_call_operand.hbm [shape: f32[16,8,64], index: 4, kind: input, shape index: {}]
  %s5 = inlined_call_operand.vmem [shape: f32[16,8,1], index: 5, kind: input, shape index: {}]
  %s6 = inlined_call_operand.vmem [shape: bf16[64,128], index: 6, kind: input, shape index: {}]
  %s7 = inlined_call_operand.vmem [shape: f32[1,128], index: 7, kind: input, shape index: {}]
  %s8 = inlined_call_operand.hbm [shape: bf16[96,128], index: 8, kind: input, shape index: {}]
  %s9 = inlined_call_operand.vmem [shape: f32[1,128], index: 9, kind: input, shape index: {}]
  %s10 = inlined_call_operand.hbm [shape: bf16[64,64], index: 10, kind: input, shape index: {}]
  %s11 = inlined_call_operand.vmem [shape: f32[1,64], index: 11, kind: input, shape index: {}]
  %s12 = inlined_call_operand.hbm [shape: bf16[128,128], index: 12, kind: input, shape index: {}]
  %s13 = inlined_call_operand.vmem [shape: f32[1,128], index: 13, kind: input, shape index: {}]
  %s14 = inlined_call_operand.hbm [shape: f32[1,8,128], index: 14, kind: output, shape index: {0}]
  %s15 = inlined_call_operand.hbm [shape: f32[8,64], index: 15, kind: output, shape index: {1}]
  %16 = xla_tuple %s14, %s15
  %s17 = sld [smem:[#allocation0]]
  $region102: #{tpu_custom_call.1} parent=0
    _
  %s19 = ssub.s32 1, %s17
  %s20 = scalar_select 0, %s19, %s17
  $region1: #{tpu_custom_call.1} parent=0
    #allocation3 [shape = 'u8[4096]{0}', space=vmem, size = 0x1000, scoped, tag = 'input window, operand 0, single buffered']
    #allocation4 [shape = 's32[1]{0}', space=sflag, size = 0x4, scoped, tag = 'scoped memory for tpu_custom_call.1']
    #allocation5 [shape = 's32[1]{0}', space=sflag, size = 0x4, scoped, tag = 'scoped memory for tpu_custom_call.1']
    #allocation6 [shape = 'u8[4096]{0}', space=vmem, size = 0x1000, scoped, tag = 'input window, operand 2, single buffered']
    #allocation7 [shape = 's32[1]{0}', space=sflag, size = 0x4, scoped, tag = 'scoped memory for tpu_custom_call.1']
    #allocation8 [shape = 'u8[65536]{0}', space=vmem, size = 0x10000, scoped, tag = 'input window, operand 4, single buffered']
    #allocation9 [shape = 'u8[24576]{0}', space=vmem, size = 0x6000, scoped, tag = 'input window, operand 8, single buffered']
    #allocation10 [shape = 's32[1]{0}', space=sflag, size = 0x4, scoped, tag = 'scoped memory for tpu_custom_call.1']
    #allocation11 [shape = 'u8[16384]{0}', space=vmem, size = 0x4000, scoped, tag = 'input window, operand 10, single buffered']
    #allocation12 [shape = 'u8[32768]{0}', space=vmem, size = 0x8000, scoped, tag = 'input window, operand 12, single buffered']
    #allocation13 [shape = 's32[1]{0}', space=sflag, size = 0x4, scoped, tag = 'scoped memory for tpu_custom_call.1']
    #allocation14 [shape = 'u8[4096]{0}', space=vmem, size = 0x1000, scoped, tag = 'output window, operand 0, single buffered']
    #allocation15 [shape = 'u8[4096]{0}', space=vmem, size = 0x1000, scoped, tag = 'output window, operand 1, single buffered']
    #allocation16 [shape = 's32[1]{0}', space=sflag, size = 0x4, scoped, tag = 'scoped memory for tpu_custom_call.1']
    %21 = vsyncpa [#allocation4], 0
    %22 = vsyncpa [#allocation7], 0
    %23 = vsyncpa [#allocation10], 0
    %24 = vsyncpa [#allocation13], 0
    %25 = vsyncpa [#allocation5], 0
    %26 = vsyncpa [#allocation16], 0
    // Predicated region
    $region2: #{tpu_custom_call.1} parent=1 // pred_check
      _
    $region3: #{tpu_custom_call.1} parent=1 // pred_check_branch
      %28 = sbr.rel (0) target = $region5
    $region4: #{tpu_custom_call.1} parent=1 // pred_region
      %s30 = ssub.s32 128, 128
      %31 = vsyncadd [#allocation4], %s30
      %s33 = sshll.u32 [#allocation3], 4
      %s34 = int_to_ptr.vmem [resolvable:$true] %s33
      %36 = dma.hbm_to_vmem [thread:$0]  %s0, 128, %s34, [#allocation4]
    $region5: #{tpu_custom_call.1} parent=1 // pred_fallthru
      _
    // Predicated region
    $region6: #{tpu_custom_call.1} parent=1 // pred_check
      _
    $region7: #{tpu_custom_call.1} parent=1 // pred_check_branch
      %38 = sbr.rel (0) target = $region9
    $region8: #{tpu_custom_call.1} parent=1 // pred_region
      _
    $region9: #{tpu_custom_call.1} parent=1 // pred_fallthru
      _
    // Predicated region
    $region10: #{tpu_custom_call.1} parent=1 // pred_check
      _
    $region11: #{tpu_custom_call.1} parent=1 // pred_check_branch
      %40 = sbr.rel (0) target = $region13
    $region12: #{tpu_custom_call.1} parent=1 // pred_region
      %s42 = ssub.s32 128, 128
      %43 = vsyncadd [#allocation7], %s42
      %s45 = sshll.u32 [#allocation6], 4
      %s46 = int_to_ptr.vmem [resolvable:$true] %s45
      %48 = dma.hbm_to_vmem [thread:$0]  %s2, 128, %s46, [#allocation7]
    $region13: #{tpu_custom_call.1} parent=1 // pred_fallthru
      _
    // Predicated region
    $region14: #{tpu_custom_call.1} parent=1 // pred_check
      _
    $region15: #{tpu_custom_call.1} parent=1 // pred_check_branch
      %50 = sbr.rel (0) target = $region17
    $region16: #{tpu_custom_call.1} parent=1 // pred_region
      _
    $region17: #{tpu_custom_call.1} parent=1 // pred_fallthru
      _
    // Predicated region
    $region18: #{tpu_custom_call.1} parent=1 // pred_check
      _
    $region19: #{tpu_custom_call.1} parent=1 // pred_check_branch
      %52 = sbr.rel (0) target = $region21
    $region20: #{tpu_custom_call.1} parent=1 // pred_region
      %s54 = ssub.s32 2048, 2048
      %55 = vsyncadd [#allocation7], %s54
      %s56 = sshll.u32 [#allocation8], 4
      %s57 = int_to_ptr.vmem [resolvable:$true] %s56
      %62 = dma.hbm_to_vmem [thread:$0]  %s4, 2048, %s57, [#allocation7], 128, 128, 8
    $region21: #{tpu_custom_call.1} parent=1 // pred_fallthru
      _
    // Predicated region
    $region22: #{tpu_custom_call.1} parent=1 // pred_check
      _
    $region23: #{tpu_custom_call.1} parent=1 // pred_check_branch
      %64 = sbr.rel (0) target = $region25
    $region24: #{tpu_custom_call.1} parent=1 // pred_region
      _
    $region25: #{tpu_custom_call.1} parent=1 // pred_fallthru
      _
    // Predicated region
    $region26: #{tpu_custom_call.1} parent=1 // pred_check
      _
    $region27: #{tpu_custom_call.1} parent=1 // pred_check_branch
      %66 = sbr.rel (0) target = $region29
    $region28: #{tpu_custom_call.1} parent=1 // pred_region
      _
    $region29: #{tpu_custom_call.1} parent=1 // pred_fallthru
      _
    // Predicated region
    $region30: #{tpu_custom_call.1} parent=1 // pred_check
      _
    $region31: #{tpu_custom_call.1} parent=1 // pred_check_branch
      %68 = sbr.rel (0) target = $region33
    $region32: #{tpu_custom_call.1} parent=1 // pred_region
      _
    $region33: #{tpu_custom_call.1} parent=1 // pred_fallthru
      _
    // Predicated region
    $region34: #{tpu_custom_call.1} parent=1 // pred_check
      _
    $region35: #{tpu_custom_call.1} parent=1 // pred_check_branch
      %70 = sbr.rel (0) target = $region37
    $region36: #{tpu_custom_call.1} parent=1 // pred_region
      %s72 = ssub.s32 768, 768
      %73 = vsyncadd [#allocation10], %s72
      %s74 = sshll.u32 [#allocation9], 4
      %s75 = int_to_ptr.vmem [resolvable:$true] %s74
      %80 = dma.hbm_to_vmem [thread:$0]  %s8, 768, %s75, [#allocation10], 64, 64, 4
    $region37: #{tpu_custom_call.1} parent=1 // pred_fallthru
      _
    // Predicated region
    $region38: #{tpu_custom_call.1} parent=1 // pred_check
      _
    $region39: #{tpu_custom_call.1} parent=1 // pred_check_branch
      %82 = sbr.rel (0) target = $region41
    $region40: #{tpu_custom_call.1} parent=1 // pred_region
      _
    $region41: #{tpu_custom_call.1} parent=1 // pred_fallthru
      _
    // Predicated region
    $region42: #{tpu_custom_call.1} parent=1 // pred_check
      _
    $region43: #{tpu_custom_call.1} parent=1 // pred_check_branch
      %84 = sbr.rel (0) target = $region45
    $region44: #{tpu_custom_call.1} parent=1 // pred_region
      %s86 = ssub.s32 512, 512
      %87 = vsyncadd [#allocation10], %s86
      %s88 = sshll.u32 [#allocation11], 4
      %s89 = int_to_ptr.vmem [resolvable:$true] %s88
      %94 = dma.hbm_to_vmem [thread:$0]  %s10, 512, %s89, [#allocation10], 64, 64, 4
    $region45: #{tpu_custom_call.1} parent=1 // pred_fallthru
      _
    // Predicated region
    $region46: #{tpu_custom_call.1} parent=1 // pred_check
      _
    $region47: #{tpu_custom_call.1} parent=1 // pred_check_branch
      %96 = sbr.rel (0) target = $region49
    $region48: #{tpu_custom_call.1} parent=1 // pred_region
      _
    $region49: #{tpu_custom_call.1} parent=1 // pred_fallthru
      _
    // Predicated region
    $region50: #{tpu_custom_call.1} parent=1 // pred_check
      _
    $region51: #{tpu_custom_call.1} parent=1 // pred_check_branch
      %98 = sbr.rel (0) target = $region53
    $region52: #{tpu_custom_call.1} parent=1 // pred_region
      %s100 = ssub.s32 1024, 1024
      %101 = vsyncadd [#allocation13], %s100
      %s102 = sshll.u32 [#allocation12], 4
      %s103 = int_to_ptr.vmem [resolvable:$true] %s102
      %108 = dma.hbm_to_vmem [thread:$0]  %s12, 1024, %s103, [#allocation13], 64, 64, 4
    $region53: #{tpu_custom_call.1} parent=1 // pred_fallthru
      _
    // Predicated region
    $region54: #{tpu_custom_call.1} parent=1 // pred_check
      _
    $region55: #{tpu_custom_call.1} parent=1 // pred_check_branch
      %110 = sbr.rel (0) target = $region57
    $region56: #{tpu_custom_call.1} parent=1 // pred_region
      _
    $region57: #{tpu_custom_call.1} parent=1 // pred_fallthru
      _
    // Predicated region
    $region58: #{tpu_custom_call.1} parent=1 // pred_check
      _
    $region59: #{tpu_custom_call.1} parent=1 // pred_check_branch
      %112 = sbr.rel (0) target = $region61
    $region60: #{tpu_custom_call.1} parent=1 // pred_region
      %113 = dma.done [#allocation4], 128
    $region61: #{tpu_custom_call.1} parent=1 // pred_fallthru
      _
    // Predicated region
    $region62: #{tpu_custom_call.1} parent=1 // pred_check
      _
    $region63: #{tpu_custom_call.1} parent=1 // pred_check_branch
      %115 = sbr.rel (0) target = $region65
    $region64: #{tpu_custom_call.1} parent=1 // pred_region
      %116 = dma.done [#allocation7], 128
    $region65: #{tpu_custom_call.1} parent=1 // pred_fallthru
      _
    // Predicated region
    $region66: #{tpu_custom_call.1} parent=1 // pred_check
      _
    $region67: #{tpu_custom_call.1} parent=1 // pred_check_branch
      %118 = sbr.rel (0) target = $region69
    $region68: #{tpu_custom_call.1} parent=1 // pred_region
      %119 = dma.done [#allocation7], 2048
    $region69: #{tpu_custom_call.1} parent=1 // pred_fallthru
      _
    // Predicated region
    $region70: #{tpu_custom_call.1} parent=1 // pred_check
      _
    $region71: #{tpu_custom_call.1} parent=1 // pred_check_branch
      %121 = sbr.rel (0) target = $region73
    $region72: #{tpu_custom_call.1} parent=1 // pred_region
      %122 = dma.done [#allocation10], 768
    $region73: #{tpu_custom_call.1} parent=1 // pred_fallthru
      _
    // Predicated region
    $region74: #{tpu_custom_call.1} parent=1 // pred_check
      _
    $region75: #{tpu_custom_call.1} parent=1 // pred_check_branch
      %124 = sbr.rel (0) target = $region77
    $region76: #{tpu_custom_call.1} parent=1 // pred_region
      %125 = dma.done [#allocation10], 512
    $region77: #{tpu_custom_call.1} parent=1 // pred_fallthru
      _
    // Predicated region
    $region78: #{tpu_custom_call.1} parent=1 // pred_check
      _
    $region79: #{tpu_custom_call.1} parent=1 // pred_check_branch
      %127 = sbr.rel (0) target = $region81
    $region80: #{tpu_custom_call.1} parent=1 // pred_region
      %128 = dma.done [#allocation13], 1024
    $region81: #{tpu_custom_call.1} parent=1 // pred_fallthru
      _
    %p130 = scmp.eq.s32.totalorder 0, 0
    // Predicated region
    $region82: #{tpu_custom_call.1} parent=1 // pred_check
      %p131 = pneg %p130
    $region83: #{tpu_custom_call.1} parent=1 // pred_check_branch
      %133 = sbr.rel (%p131) target = $region85
    $region84: #{tpu_custom_call.1} parent=1 // pred_region
      %v134 = vld [vmem:[#allocation6] sm:$0xff]
      %vm135 = vcmask 523264
      %136 = vst.msk [vmem:[#allocation2] sm:$0xff] %vm135, %v134
    $region85: #{tpu_custom_call.1} parent=1 // pred_fallthru
      _
    %v137 = vld [vmem:[#allocation3] sm:$0xff]
    %v138 = vld [vmem:[%s1] sm:$0xff]
    %v139 = vld [vmem:[#allocation2] sm:$0xff]
    %141 = vrot.lane.b32.xlu0 %v139, 32
    %v142 = vpop.permute.xlu0 %141
    %vm144 = vcmask 261120
    %v145 = vsel %vm144, %v137, %v142
    %v146 = vpack.c.bf16 %v145, %v145
    %v147 = vld [vmem:[%s6] sm:$0xf]
    %v148 = vld [vmem:[%s6 + $0x4] sm:$0xf]
    %v149 = vld [vmem:[%s6 + $0x8] sm:$0xf]
    %v150 = vld [vmem:[%s6 + $0xc] sm:$0xf]
    %v151 = vld [vmem:[%s6 + $0x10] sm:$0xf]
    %v152 = vld [vmem:[%s6 + $0x14] sm:$0xf]
    %v153 = vld [vmem:[%s6 + $0x18] sm:$0xf]
    %v154 = vld [vmem:[%s6 + $0x1c] sm:$0xf]
    %v155 = vld [vmem:[%s7] sm:$0x1]
    %v157 = vlaneseq
    %v158 = vshrl.u32 %v157, 7
    %v159 = vsub.s32 0, %v158
    %v160 = vrot.slane %v155, %v159
    %v170 = vunpack.c.l.b16 %v147
    %v171 = vunpack.c.l.b16 %v148
    %v172 = vunpack.c.l.b16 %v149
    %v173 = vunpack.c.l.b16 %v150
    %v174 = vunpack.c.l.b16 %v151
    %v175 = vunpack.c.l.b16 %v152
    %v176 = vunpack.c.l.b16 %v153
    %v177 = vunpack.c.l.b16 %v154
    %v178 = vpack.c.b16 %v171, %v170
    %v179 = vpack.c.b16 %v173, %v172
    %v180 = vpack.c.b16 %v175, %v174
    %v181 = vpack.c.b16 %v177, %v176
    %vm186 = vcmask 523264
    %v188 = vsel %vm186, %v146, 0
    %190 = vmatprep.subr.bf16.mxu0 0
    %191 = vmatpush1.bf16.msra.mxu0 %v178
    %192 = vmatprep.subr.bf16.mxu0 0
    %193 = vmatpush1.bf16.msra.mxu0 %v179
    %194 = vmatprep.subr.bf16.mxu0 0
    %195 = vmatpush1.bf16.msra.mxu0 %v180
    %196 = vmatprep.subr.bf16.mxu0 0
    %197 = vmatpush1.bf16.msra.mxu0 %v181
    %198 = vmatprep.subr.bf16.mxu0 0
    %199 = vmatpush1.bf16.msra.mxu0 0
    %200 = vmatprep.subr.bf16.mxu0 0
    %201 = vmatpush1.bf16.msra.mxu0 0
    %202 = vmatprep.subr.bf16.mxu0 0
    %203 = vmatpush1.bf16.msra.mxu0 0
    %204 = vmatprep.subr.bf16.mxu0 0
    %205 = vmatpush1.bf16.msra.mxu0 0
    %206 = vmatprep.subr.bf16.mxu0 0
    %207 = vmatpush1.bf16.msra.mxu0 0
    %208 = vmatprep.subr.bf16.mxu0 0
    %209 = vmatpush1.bf16.msra.mxu0 0
    %210 = vmatprep.subr.bf16.mxu0 0
    %211 = vmatpush1.bf16.msra.mxu0 0
    %212 = vmatprep.subr.bf16.mxu0 0
    %213 = vmatpush1.bf16.msra.mxu0 0
    %214 = vmatprep.subr.bf16.mxu0 0
    %215 = vmatpush1.bf16.msra.mxu0 0
    %216 = vmatprep.subr.bf16.mxu0 0
    %217 = vmatpush1.bf16.msra.mxu0 0
    %218 = vmatprep.subr.bf16.mxu0 0
    %219 = vmatpush1.bf16.msra.mxu0 0
    %220 = vmatprep.subr.bf16.mxu0 0
    %221 = vmatpush1.bf16.msra.mxu0 0
    %222 = vmatprep.mubr.bf16.mxu0 0
    %223 = vmatmul.mubr.bf16.gmra.mrb[0].mxu0 %v188
    %v224 = vpop.f32.mrb[0].mxu0
    %v225 = vadd.f32 %v160, %v224
    %v226 = vpop.f32.mrb[0].mxu0
    %v227 = vpop.f32.mrb[0].mxu0
    %v228 = vpop.f32.mrb[0].mxu0
    %229 = vdwg.mxu0
    %v230 = vmul.f32 %v225, 0.5
    %v231 = vtanh.pop %v230
    %v232 = vadd.f32 %v231, 1.0
    %v233 = vmul.f32 %v232, 0.5
    %v234 = vtanh.pop %v225
    %v235 = vmul.f32 %v233, %v139
    %237 = vrot.lane.b32.xlu0 %v234, 32
    %v238 = vpop.permute.xlu0 %237
    %v240 = vmul.f32 %v233, %v238
    %242 = vrot.lane.b32.xlu0 %v240, 32
    %v243 = vpop.permute.xlu0 %242
    %v245 = vadd.f32 %v235, %v243
    %v246 = vtanh.pop %v245
    %248 = vrot.lane.b32.xlu0 %v246, 32
    %v249 = vpop.permute.xlu0 %248
    %v251 = vmul.f32 %v233, %v249
    %253 = vset.pattern.permute.xlu0 0
    %254 = vperm.xlu0 %253, %v138
    %v255 = vpop.permute.xlu0 %254
    %v257 = vmul.f32 %v255, %v251
    %v258 = vsub.f32 1.0, %v138
    %260 = vset.pattern.permute.xlu0 0
    %261 = vperm.xlu0 %260, %v258
    %v262 = vpop.permute.xlu0 %261
    %v264 = vmul.f32 %v262, %v139
    %266 = vrot.lane.b32.xlu0 %v264, 64
    %v267 = vpop.permute.xlu0 %266
    %v269 = vadd.f32 %v257, %v267
    %v270 = vmul.f32 %v255, %v245
    %v271 = vadd.f32 %v270, %v264
    %273 = vrot.lane.b32.xlu0 %v269, 64
    %v274 = vpop.permute.xlu0 %273
    %v276 = vsel %vm144, %v274, %v271
    %v277 = vpack.c.bf16 %v276, %v276
    %v278 = vld [vmem:[#allocation11] sm:$0xf]
    %v279 = vld [vmem:[#allocation11 + $0x4] sm:$0xf]
    %v280 = vld [vmem:[#allocation11 + $0x8] sm:$0xf]
    %v281 = vld [vmem:[#allocation11 + $0xc] sm:$0xf]
    %v282 = vld [vmem:[#allocation11 + $0x10] sm:$0xf]
    %v283 = vld [vmem:[#allocation11 + $0x14] sm:$0xf]
    %v284 = vld [vmem:[#allocation11 + $0x18] sm:$0xf]
    %v285 = vld [vmem:[#allocation11 + $0x1c] sm:$0xf]
    %v294 = vunpack.c.l.b16 %v278
    %v295 = vunpack.c.l.b16 %v279
    %v296 = vunpack.c.l.b16 %v280
    %v297 = vunpack.c.l.b16 %v281
    %v298 = vunpack.c.l.b16 %v282
    %v299 = vunpack.c.l.b16 %v283
    %v300 = vunpack.c.l.b16 %v284
    %v301 = vunpack.c.l.b16 %v285
    %v302 = vpack.c.b16 %v295, %v294
    %v303 = vpack.c.b16 %v297, %v296
    %v304 = vpack.c.b16 %v299, %v298
    %v305 = vpack.c.b16 %v301, %v300
    %v311 = vsel %vm186, %v277, 0
    %313 = vmatprep.subr.bf16.mxu0 0
    %314 = vmatpush1.bf16.msra.mxu0 %v302
    %315 = vmatprep.subr.bf16.mxu0 0
    %316 = vmatpush1.bf16.msra.mxu0 %v303
    %317 = vmatprep.subr.bf16.mxu0 0
    %318 = vmatpush1.bf16.msra.mxu0 %v304
    %319 = vmatprep.subr.bf16.mxu0 0
    %320 = vmatpush1.bf16.msra.mxu0 %v305
    %321 = vmatprep.subr.bf16.mxu0 0
    %322 = vmatpush1.bf16.msra.mxu0 0
    %323 = vmatprep.subr.bf16.mxu0 0
    %324 = vmatpush1.bf16.msra.mxu0 0
    %325 = vmatprep.subr.bf16.mxu0 0
    %326 = vmatpush1.bf16.msra.mxu0 0
    %327 = vmatprep.subr.bf16.mxu0 0
    %328 = vmatpush1.bf16.msra.mxu0 0
    %329 = vmatprep.subr.bf16.mxu0 0
    %330 = vmatpush1.bf16.msra.mxu0 0
    %331 = vmatprep.subr.bf16.mxu0 0
    %332 = vmatpush1.bf16.msra.mxu0 0
    %333 = vmatprep.subr.bf16.mxu0 0
    %334 = vmatpush1.bf16.msra.mxu0 0
    %335 = vmatprep.subr.bf16.mxu0 0
    %336 = vmatpush1.bf16.msra.mxu0 0
    %337 = vmatprep.subr.bf16.mxu0 0
    %338 = vmatpush1.bf16.msra.mxu0 0
    %339 = vmatprep.subr.bf16.mxu0 0
    %340 = vmatpush1.bf16.msra.mxu0 0
    %341 = vmatprep.subr.bf16.mxu0 0
    %342 = vmatpush1.bf16.msra.mxu0 0
    %343 = vmatprep.subr.bf16.mxu0 0
    %344 = vmatpush1.bf16.msra.mxu0 0
    %345 = vmatprep.mubr.bf16.mxu0 0
    %346 = vmatmul.mubr.bf16.gmra.mrb[0].mxu0 %v311
    %v347 = vpop.f32.mrb[0].mxu0
    %v348 = vadd.f32 0.0, %v347
    %v349 = vpop.f32.mrb[0].mxu0
    %v350 = vpop.f32.mrb[0].mxu0
    %v351 = vpop.f32.mrb[0].mxu0
    %352 = vdwg.mxu0
    %v353 = vld [vmem:[#allocation8] sm:$0xff]
    %v354 = vld [vmem:[#allocation8 + $0x8] sm:$0xff]
    %v355 = vld [vmem:[#allocation8 + $0x10] sm:$0xff]
    %v356 = vld [vmem:[#allocation8 + $0x18] sm:$0xff]
    %v357 = vld [vmem:[#allocation8 + $0x20] sm:$0xff]
    %v358 = vld [vmem:[#allocation8 + $0x28] sm:$0xff]
    %v359 = vld [vmem:[#allocation8 + $0x30] sm:$0xff]
    %v360 = vld [vmem:[#allocation8 + $0x38] sm:$0xff]
    %v361 = vld [vmem:[#allocation8 + $0x40] sm:$0xff]
    %v362 = vld [vmem:[#allocation8 + $0x48] sm:$0xff]
    %v363 = vld [vmem:[#allocation8 + $0x50] sm:$0xff]
    %v364 = vld [vmem:[#allocation8 + $0x58] sm:$0xff]
    %v365 = vld [vmem:[#allocation8 + $0x60] sm:$0xff]
    %v366 = vld [vmem:[#allocation8 + $0x68] sm:$0xff]
    %v367 = vld [vmem:[#allocation8 + $0x70] sm:$0xff]
    %v368 = vld [vmem:[#allocation8 + $0x78] sm:$0xff]
    %v369 = vadd.f32 %v353, %v348
    %v370 = vadd.f32 %v354, %v348
    %v371 = vadd.f32 %v355, %v348
    %v372 = vadd.f32 %v356, %v348
    %v373 = vadd.f32 %v357, %v348
    %v374 = vadd.f32 %v358, %v348
    %v375 = vadd.f32 %v359, %v348
    %v376 = vadd.f32 %v360, %v348
    %v377 = vadd.f32 %v361, %v348
    %v378 = vadd.f32 %v362, %v348
    %v379 = vadd.f32 %v363, %v348
    %v380 = vadd.f32 %v364, %v348
    %v381 = vadd.f32 %v365, %v348
    %v382 = vadd.f32 %v366, %v348
    %v383 = vadd.f32 %v367, %v348
    %v384 = vadd.f32 %v368, %v348
    %v385 = vtanh.pop %v369
    %v386 = vtanh.pop %v370
    %v387 = vtanh.pop %v371
    %v388 = vtanh.pop %v372
    %v389 = vtanh.pop %v373
    %v390 = vtanh.pop %v374
    %v391 = vtanh.pop %v375
    %v392 = vtanh.pop %v376
    %v393 = vtanh.pop %v377
    %v394 = vtanh.pop %v378
    %v395 = vtanh.pop %v379
    %v396 = vtanh.pop %v380
    %v397 = vtanh.pop %v381
    %v398 = vtanh.pop %v382
    %v399 = vtanh.pop %v383
    %v400 = vtanh.pop %v384
    %v401 = vld [vmem:[%s11] sm:$0x1]
    %v403 = vlaneseq
    %v404 = vshrl.u32 %v403, 7
    %v405 = vsub.s32 0, %v404
    %v406 = vrot.slane %v401, %v405
    %v408 = vmul.f32 %v385, %v406
    %v409 = vmul.f32 %v386, %v406
    %v410 = vmul.f32 %v387, %v406
    %v411 = vmul.f32 %v388, %v406
    %v412 = vmul.f32 %v389, %v406
    %v413 = vmul.f32 %v390, %v406
    %v414 = vmul.f32 %v391, %v406
    %v415 = vmul.f32 %v392, %v406
    %v416 = vmul.f32 %v393, %v406
    %v417 = vmul.f32 %v394, %v406
    %v418 = vmul.f32 %v395, %v406
    %v419 = vmul.f32 %v396, %v406
    %v420 = vmul.f32 %v397, %v406
    %v421 = vmul.f32 %v398, %v406
    %v422 = vmul.f32 %v399, %v406
    %v423 = vmul.f32 %v400, %v406
    %v424 = vsel %vm186, %v408, 0.0
    %425 = vadd.xlane.f32.xlu0 %v424
    %v426 = vpop.xlane.xlu0 %425
    %v427 = vsel %vm186, %v409, 0.0
    %428 = vadd.xlane.f32.xlu0 %v427
    %v429 = vpop.xlane.xlu0 %428
    %v430 = vsel %vm186, %v410, 0.0
    %431 = vadd.xlane.f32.xlu0 %v430
    %v432 = vpop.xlane.xlu0 %431
    %v433 = vsel %vm186, %v411, 0.0
    %434 = vadd.xlane.f32.xlu0 %v433
    %v435 = vpop.xlane.xlu0 %434
    %v436 = vsel %vm186, %v412, 0.0
    %437 = vadd.xlane.f32.xlu0 %v436
    %v438 = vpop.xlane.xlu0 %437
    %v439 = vsel %vm186, %v413, 0.0
    %440 = vadd.xlane.f32.xlu0 %v439
    %v441 = vpop.xlane.xlu0 %440
    %v442 = vsel %vm186, %v414, 0.0
    %443 = vadd.xlane.f32.xlu0 %v442
    %v444 = vpop.xlane.xlu0 %443
    %v445 = vsel %vm186, %v415, 0.0
    %446 = vadd.xlane.f32.xlu0 %v445
    %v447 = vpop.xlane.xlu0 %446
    %v448 = vsel %vm186, %v416, 0.0
    %449 = vadd.xlane.f32.xlu0 %v448
    %v450 = vpop.xlane.xlu0 %449
    %v451 = vsel %vm186, %v417, 0.0
    %452 = vadd.xlane.f32.xlu0 %v451
    %v453 = vpop.xlane.xlu0 %452
    %v454 = vsel %vm186, %v418, 0.0
    %455 = vadd.xlane.f32.xlu0 %v454
    %v456 = vpop.xlane.xlu0 %455
    %v457 = vsel %vm186, %v419, 0.0
    %458 = vadd.xlane.f32.xlu0 %v457
    %v459 = vpop.xlane.xlu0 %458
    %v460 = vsel %vm186, %v420, 0.0
    %461 = vadd.xlane.f32.xlu0 %v460
    %v462 = vpop.xlane.xlu0 %461
    %v463 = vsel %vm186, %v421, 0.0
    %464 = vadd.xlane.f32.xlu0 %v463
    %v465 = vpop.xlane.xlu0 %464
    %v466 = vsel %vm186, %v422, 0.0
    %467 = vadd.xlane.f32.xlu0 %v466
    %v468 = vpop.xlane.xlu0 %467
    %v469 = vsel %vm186, %v423, 0.0
    %470 = vadd.xlane.f32.xlu0 %v469
    %v471 = vpop.xlane.xlu0 %470
    %v472 = vld [vmem:[%s5] sm:$0xff]
    %v473 = vld [vmem:[%s5 + $0x8] sm:$0xff]
    %v474 = vld [vmem:[%s5 + $0x10] sm:$0xff]
    %v475 = vld [vmem:[%s5 + $0x18] sm:$0xff]
    %v476 = vld [vmem:[%s5 + $0x20] sm:$0xff]
    %v477 = vld [vmem:[%s5 + $0x28] sm:$0xff]
    %v478 = vld [vmem:[%s5 + $0x30] sm:$0xff]
    %v479 = vld [vmem:[%s5 + $0x38] sm:$0xff]
    %v480 = vld [vmem:[%s5 + $0x40] sm:$0xff]
    %v481 = vld [vmem:[%s5 + $0x48] sm:$0xff]
    %v482 = vld [vmem:[%s5 + $0x50] sm:$0xff]
    %v483 = vld [vmem:[%s5 + $0x58] sm:$0xff]
    %v484 = vld [vmem:[%s5 + $0x60] sm:$0xff]
    %v485 = vld [vmem:[%s5 + $0x68] sm:$0xff]
    %v486 = vld [vmem:[%s5 + $0x70] sm:$0xff]
    %v487 = vld [vmem:[%s5 + $0x78] sm:$0xff]
    %v488 = vadd.f32 %v426, %v472
    %v489 = vadd.f32 %v429, %v473
    %v490 = vadd.f32 %v432, %v474
    %v491 = vadd.f32 %v435, %v475
    %v492 = vadd.f32 %v438, %v476
    %v493 = vadd.f32 %v441, %v477
    %v494 = vadd.f32 %v444, %v478
    %v495 = vadd.f32 %v447, %v479
    %v496 = vadd.f32 %v450, %v480
    %v497 = vadd.f32 %v453, %v481
    %v498 = vadd.f32 %v456, %v482
    %v499 = vadd.f32 %v459, %v483
    %v500 = vadd.f32 %v462, %v484
    %v501 = vadd.f32 %v465, %v485
    %v502 = vadd.f32 %v468, %v486
    %v503 = vadd.f32 %v471, %v487
    %vm504 = vcmask 7168
    %v505 = vsel %vm504, %v488, -inf
    %v506 = vsel %vm504, %v489, -inf
    %v507 = vsel %vm504, %v490, -inf
    %v508 = vsel %vm504, %v491, -inf
    %v509 = vsel %vm504, %v492, -inf
    %v510 = vmax.f32 %v505, %v509
    %v511 = vsel %vm504, %v493, -inf
    %v512 = vmax.f32 %v506, %v511
    %v513 = vsel %vm504, %v494, -inf
    %v514 = vmax.f32 %v507, %v513
    %v515 = vsel %vm504, %v495, -inf
    %v516 = vmax.f32 %v508, %v515
    %v517 = vsel %vm504, %v496, -inf
    %v518 = vmax.f32 %v510, %v517
    %v519 = vsel %vm504, %v497, -inf
    %v520 = vmax.f32 %v512, %v519
    %v521 = vsel %vm504, %v498, -inf
    %v522 = vmax.f32 %v514, %v521
    %v523 = vsel %vm504, %v499, -inf
    %v524 = vmax.f32 %v516, %v523
    %v525 = vsel %vm504, %v500, -inf
    %v526 = vmax.f32 %v518, %v525
    %v527 = vsel %vm504, %v501, -inf
    %v528 = vmax.f32 %v520, %v527
    %v529 = vsel %vm504, %v502, -inf
    %v530 = vmax.f32 %v522, %v529
    %v531 = vsel %vm504, %v503, -inf
    %v532 = vmax.f32 %v524, %v531
    %v533 = vmax.f32 %v526, %v528
    %v534 = vmax.f32 %v530, %v532
    %v535 = vmax.f32 %v533, %v534
    %v536 = vsub.f32 %v488, %v535
    %v537 = vsub.f32 %v489, %v535
    %v538 = vsub.f32 %v490, %v535
    %v539 = vsub.f32 %v491, %v535
    %v540 = vsub.f32 %v492, %v535
    %v541 = vsub.f32 %v493, %v535
    %v542 = vsub.f32 %v494, %v535
    %v543 = vsub.f32 %v495, %v535
    %v544 = vsub.f32 %v496, %v535
    %v545 = vsub.f32 %v497, %v535
    %v546 = vsub.f32 %v498, %v535
    %v547 = vsub.f32 %v499, %v535
    %v548 = vsub.f32 %v500, %v535
    %v549 = vsub.f32 %v501, %v535
    %v550 = vsub.f32 %v502, %v535
    %v551 = vsub.f32 %v503, %v535
    %v552 = vmul.f32 %v536, 1.442695
    %v553 = vpow.pop %v552
    %v554 = vmul.f32 %v537, 1.442695
    %v555 = vpow.pop %v554
    %v556 = vmul.f32 %v538, 1.442695
    %v557 = vpow.pop %v556
    %v558 = vmul.f32 %v539, 1.442695
    %v559 = vpow.pop %v558
    %v560 = vmul.f32 %v540, 1.442695
    %v561 = vpow.pop %v560
    %v562 = vmul.f32 %v541, 1.442695
    %v563 = vpow.pop %v562
    %v564 = vmul.f32 %v542, 1.442695
    %v565 = vpow.pop %v564
    %v566 = vmul.f32 %v543, 1.442695
    %v567 = vpow.pop %v566
    %v568 = vmul.f32 %v544, 1.442695
    %v569 = vpow.pop %v568
    %v570 = vmul.f32 %v545, 1.442695
    %v571 = vpow.pop %v570
    %v572 = vmul.f32 %v546, 1.442695
    %v573 = vpow.pop %v572
    %v574 = vmul.f32 %v547, 1.442695
    %v575 = vpow.pop %v574
    %v576 = vmul.f32 %v548, 1.442695
    %v577 = vpow.pop %v576
    %v578 = vmul.f32 %v549, 1.442695
    %v579 = vpow.pop %v578
    %v580 = vmul.f32 %v550, 1.442695
    %v581 = vpow.pop %v580
    %v582 = vmul.f32 %v551, 1.442695
    %v583 = vpow.pop %v582
    %v584 = vsel %vm504, %v553, 0.0
    %v585 = vsel %vm504, %v555, 0.0
    %v586 = vadd.f32 %v584, %v585
    %v587 = vsel %vm504, %v557, 0.0
    %v588 = vadd.f32 %v586, %v587
    %v589 = vsel %vm504, %v559, 0.0
    %v590 = vadd.f32 %v588, %v589
    %v591 = vsel %vm504, %v561, 0.0
    %v592 = vadd.f32 %v590, %v591
    %v593 = vsel %vm504, %v563, 0.0
    %v594 = vadd.f32 %v592, %v593
    %v595 = vsel %vm504, %v565, 0.0
    %v596 = vadd.f32 %v594, %v595
    %v597 = vsel %vm504, %v567, 0.0
    %v598 = vadd.f32 %v596, %v597
    %v599 = vsel %vm504, %v569, 0.0
    %v600 = vadd.f32 %v598, %v599
    %v601 = vsel %vm504, %v571, 0.0
    %v602 = vadd.f32 %v600, %v601
    %v603 = vsel %vm504, %v573, 0.0
    %v604 = vadd.f32 %v602, %v603
    %v605 = vsel %vm504, %v575, 0.0
    %v606 = vadd.f32 %v604, %v605
    %v607 = vsel %vm504, %v577, 0.0
    %v608 = vadd.f32 %v606, %v607
    %v609 = vsel %vm504, %v579, 0.0
    %v610 = vadd.f32 %v608, %v609
    %v611 = vsel %vm504, %v581, 0.0
    %v612 = vadd.f32 %v610, %v611
    %v613 = vsel %vm504, %v583, 0.0
    %v614 = vadd.f32 %v612, %v613
    %v615 = vrcp.pop %v614
    %v616 = vmul.f32 %v553, %v615
    %v617 = vmul.f32 %v555, %v615
    %v618 = vmul.f32 %v557, %v615
    %v619 = vmul.f32 %v559, %v615
    %v620 = vmul.f32 %v561, %v615
    %v621 = vmul.f32 %v563, %v615
    %v622 = vmul.f32 %v565, %v615
    %v623 = vmul.f32 %v567, %v615
    %v624 = vmul.f32 %v569, %v615
    %v625 = vmul.f32 %v571, %v615
    %v626 = vmul.f32 %v573, %v615
    %v627 = vmul.f32 %v575, %v615
    %v628 = vmul.f32 %v577, %v615
    %v629 = vmul.f32 %v579, %v615
    %v630 = vmul.f32 %v581, %v615
    %v631 = vmul.f32 %v583, %v615
    %v632 = vld [vmem:[%s3] sm:$0xff]
    %v633 = vld [vmem:[%s3 + $0x8] sm:$0xff]
    %v634 = vld [vmem:[%s3 + $0x10] sm:$0xff]
    %v635 = vld [vmem:[%s3 + $0x18] sm:$0xff]
    %v636 = vld [vmem:[%s3 + $0x20] sm:$0xff]
    %v637 = vld [vmem:[%s3 + $0x28] sm:$0xff]
    %v638 = vld [vmem:[%s3 + $0x30] sm:$0xff]
    %v639 = vld [vmem:[%s3 + $0x38] sm:$0xff]
    %v640 = vld [vmem:[%s3 + $0x40] sm:$0xff]
    %v641 = vld [vmem:[%s3 + $0x48] sm:$0xff]
    %v642 = vld [vmem:[%s3 + $0x50] sm:$0xff]
    %v643 = vld [vmem:[%s3 + $0x58] sm:$0xff]
    %v644 = vld [vmem:[%s3 + $0x60] sm:$0xff]
    %v645 = vld [vmem:[%s3 + $0x68] sm:$0xff]
    %v646 = vld [vmem:[%s3 + $0x70] sm:$0xff]
    %v647 = vld [vmem:[%s3 + $0x78] sm:$0xff]
    %649 = vset.pattern.permute.xlu0 0
    %650 = vperm.xlu0 %649, %v616
    %v651 = vpop.permute.xlu0 %650
    %654 = vset.pattern.permute.xlu0 0
    %655 = vperm.xlu0 %654, %v617
    %v656 = vpop.permute.xlu0 %655
    %659 = vset.pattern.permute.xlu0 0
    %660 = vperm.xlu0 %659, %v618
    %v661 = vpop.permute.xlu0 %660
    %664 = vset.pattern.permute.xlu0 0
    %665 = vperm.xlu0 %664, %v619
    %v666 = vpop.permute.xlu0 %665
    %669 = vset.pattern.permute.xlu0 0
    %670 = vperm.xlu0 %669, %v620
    %v671 = vpop.permute.xlu0 %670
    %674 = vset.pattern.permute.xlu0 0
    %675 = vperm.xlu0 %674, %v621
    %v676 = vpop.permute.xlu0 %675
    %679 = vset.pattern.permute.xlu0 0
    %680 = vperm.xlu0 %679, %v622
    %v681 = vpop.permute.xlu0 %680
    %684 = vset.pattern.permute.xlu0 0
    %685 = vperm.xlu0 %684, %v623
    %v686 = vpop.permute.xlu0 %685
    %689 = vset.pattern.permute.xlu0 0
    %690 = vperm.xlu0 %689, %v624
    %v691 = vpop.permute.xlu0 %690
    %694 = vset.pattern.permute.xlu0 0
    %695 = vperm.xlu0 %694, %v625
    %v696 = vpop.permute.xlu0 %695
    %699 = vset.pattern.permute.xlu0 0
    %700 = vperm.xlu0 %699, %v626
    %v701 = vpop.permute.xlu0 %700
    %704 = vset.pattern.permute.xlu0 0
    %705 = vperm.xlu0 %704, %v627
    %v706 = vpop.permute.xlu0 %705
    %709 = vset.pattern.permute.xlu0 0
    %710 = vperm.xlu0 %709, %v628
    %v711 = vpop.permute.xlu0 %710
    %714 = vset.pattern.permute.xlu0 0
    %715 = vperm.xlu0 %714, %v629
    %v716 = vpop.permute.xlu0 %715
    %719 = vset.pattern.permute.xlu0 0
    %720 = vperm.xlu0 %719, %v630
    %v721 = vpop.permute.xlu0 %720
    %724 = vset.pattern.permute.xlu0 0
    %725 = vperm.xlu0 %724, %v631
    %v726 = vpop.permute.xlu0 %725
    %v728 = vmul.f32 %v651, %v632
    %v729 = vmul.f32 %v656, %v633
    %v730 = vmul.f32 %v661, %v634
    %v731 = vmul.f32 %v666, %v635
    %v732 = vmul.f32 %v671, %v636
    %v733 = vmul.f32 %v676, %v637
    %v734 = vmul.f32 %v681, %v638
    %v735 = vmul.f32 %v686, %v639
    %v736 = vmul.f32 %v691, %v640
    %v737 = vmul.f32 %v696, %v641
    %v738 = vmul.f32 %v701, %v642
    %v739 = vmul.f32 %v706, %v643
    %v740 = vmul.f32 %v711, %v644
    %v741 = vmul.f32 %v716, %v645
    %v742 = vmul.f32 %v721, %v646
    %v743 = vmul.f32 %v726, %v647
    %v744 = vsel %vm186, %v728, 0.0
    %v745 = vsel %vm186, %v729, 0.0
    %v746 = vadd.f32 %v744, %v745
    %v747 = vsel %vm186, %v730, 0.0
    %v748 = vadd.f32 %v746, %v747
    %v749 = vsel %vm186, %v731, 0.0
    %v750 = vadd.f32 %v748, %v749
    %v751 = vsel %vm186, %v732, 0.0
    %v752 = vadd.f32 %v750, %v751
    %v753 = vsel %vm186, %v733, 0.0
    %v754 = vadd.f32 %v752, %v753
    %v755 = vsel %vm186, %v734, 0.0
    %v756 = vadd.f32 %v754, %v755
    %v757 = vsel %vm186, %v735, 0.0
    %v758 = vadd.f32 %v756, %v757
    %v759 = vsel %vm186, %v736, 0.0
    %v760 = vadd.f32 %v758, %v759
    %v761 = vsel %vm186, %v737, 0.0
    %v762 = vadd.f32 %v760, %v761
    %v763 = vsel %vm186, %v738, 0.0
    %v764 = vadd.f32 %v762, %v763
    %v765 = vsel %vm186, %v739, 0.0
    %v766 = vadd.f32 %v764, %v765
    %v767 = vsel %vm186, %v740, 0.0
    %v768 = vadd.f32 %v766, %v767
    %v769 = vsel %vm186, %v741, 0.0
    %v770 = vadd.f32 %v768, %v769
    %v771 = vsel %vm186, %v742, 0.0
    %v772 = vadd.f32 %v770, %v771
    %v773 = vsel %vm186, %v743, 0.0
    %v774 = vadd.f32 %v772, %v773
    %776 = vrot.lane.b32.xlu0 %v774, 32
    %v777 = vpop.permute.xlu0 %776
    %v779 = vsel %vm144, %v274, %v777
    %v780 = vpack.c.bf16 %v779, %v779
    %v781 = vld [vmem:[#allocation9] sm:$0xf]
    %v782 = vld [vmem:[#allocation9 + $0x4] sm:$0xf]
    %v783 = vld [vmem:[#allocation9 + $0x8] sm:$0xf]
    %v784 = vld [vmem:[#allocation9 + $0xc] sm:$0xf]
    %v785 = vld [vmem:[#allocation9 + $0x10] sm:$0xf]
    %v786 = vld [vmem:[#allocation9 + $0x14] sm:$0xf]
    %v787 = vld [vmem:[#allocation9 + $0x18] sm:$0xf]
    %v788 = vld [vmem:[#allocation9 + $0x1c] sm:$0xf]
    %v789 = vld [vmem:[#allocation9 + $0x20] sm:$0xf]
    %v790 = vld [vmem:[#allocation9 + $0x24] sm:$0xf]
    %v791 = vld [vmem:[#allocation9 + $0x28] sm:$0xf]
    %v792 = vld [vmem:[#allocation9 + $0x2c] sm:$0xf]
    %v793 = vld [vmem:[%s9] sm:$0x1]
    %v795 = vlaneseq
    %v796 = vshrl.u32 %v795, 7
    %v797 = vsub.s32 0, %v796
    %v798 = vrot.slane %v793, %v797
    %v812 = vunpack.c.l.b16 %v781
    %v813 = vunpack.c.l.b16 %v782
    %v814 = vunpack.c.l.b16 %v783
    %v815 = vunpack.c.l.b16 %v784
    %v816 = vunpack.c.l.b16 %v785
    %v817 = vunpack.c.l.b16 %v786
    %v818 = vunpack.c.l.b16 %v787
    %v819 = vunpack.c.l.b16 %v788
    %v820 = vunpack.c.l.b16 %v789
    %v821 = vunpack.c.l.b16 %v790
    %v822 = vunpack.c.l.b16 %v791
    %v823 = vunpack.c.l.b16 %v792
    %v824 = vpack.c.b16 %v813, %v812
    %v825 = vpack.c.b16 %v815, %v814
    %v826 = vpack.c.b16 %v817, %v816
    %v827 = vpack.c.b16 %v819, %v818
    %v828 = vpack.c.b16 %v821, %v820
    %v829 = vpack.c.b16 %v823, %v822
    %vm836 = vcmask 785408
    %v838 = vsel %vm836, %v780, 0
    %840 = vmatprep.subr.bf16.mxu0 0
    %841 = vmatpush1.bf16.msra.mxu0 %v824
    %842 = vmatprep.subr.bf16.mxu0 0
    %843 = vmatpush1.bf16.msra.mxu0 %v825
    %844 = vmatprep.subr.bf16.mxu0 0
    %845 = vmatpush1.bf16.msra.mxu0 %v826
    %846 = vmatprep.subr.bf16.mxu0 0
    %847 = vmatpush1.bf16.msra.mxu0 %v827
    %848 = vmatprep.subr.bf16.mxu0 0
    %849 = vmatpush1.bf16.msra.mxu0 %v828
    %850 = vmatprep.subr.bf16.mxu0 0
    %851 = vmatpush1.bf16.msra.mxu0 %v829
    %852 = vmatprep.subr.bf16.mxu0 0
    %853 = vmatpush1.bf16.msra.mxu0 0
    %854 = vmatprep.subr.bf16.mxu0 0
    %855 = vmatpush1.bf16.msra.mxu0 0
    %856 = vmatprep.subr.bf16.mxu0 0
    %857 = vmatpush1.bf16.msra.mxu0 0
    %858 = vmatprep.subr.bf16.mxu0 0
    %859 = vmatpush1.bf16.msra.mxu0 0
    %860 = vmatprep.subr.bf16.mxu0 0
    %861 = vmatpush1.bf16.msra.mxu0 0
    %862 = vmatprep.subr.bf16.mxu0 0
    %863 = vmatpush1.bf16.msra.mxu0 0
    %864 = vmatprep.subr.bf16.mxu0 0
    %865 = vmatpush1.bf16.msra.mxu0 0
    %866 = vmatprep.subr.bf16.mxu0 0
    %867 = vmatpush1.bf16.msra.mxu0 0
    %868 = vmatprep.subr.bf16.mxu0 0
    %869 = vmatpush1.bf16.msra.mxu0 0
    %870 = vmatprep.subr.bf16.mxu0 0
    %871 = vmatpush1.bf16.msra.mxu0 0
    %872 = vmatprep.mubr.bf16.mxu0 0
    %873 = vmatmul.mubr.bf16.gmra.mrb[0].mxu0 %v838
    %v874 = vpop.f32.mrb[0].mxu0
    %v875 = vadd.f32 %v798, %v874
    %v876 = vpop.f32.mrb[0].mxu0
    %v877 = vpop.f32.mrb[0].mxu0
    %v878 = vpop.f32.mrb[0].mxu0
    %879 = vdwg.mxu0
    %v880 = vmul.f32 %v875, 0.5
    %v881 = vtanh.pop %v880
    %v882 = vadd.f32 %v881, 1.0
    %v883 = vmul.f32 %v882, 0.5
    %v884 = vmul.f32 %v883, %v271
    %v885 = vtanh.pop %v875
    %887 = vrot.lane.b32.xlu0 %v885, 32
    %v888 = vpop.permute.xlu0 %887
    %v890 = vmul.f32 %v883, %v888
    %892 = vrot.lane.b32.xlu0 %v890, 32
    %v893 = vpop.permute.xlu0 %892
    %v895 = vadd.f32 %v884, %v893
    %v896 = vtanh.pop %v895
    %898 = vrot.lane.b32.xlu0 %v896, 32
    %v899 = vpop.permute.xlu0 %898
    %v901 = vmul.f32 %v883, %v899
    %v902 = vmul.f32 %v255, %v895
    %v903 = vmul.f32 %v262, %v271
    %v904 = vadd.f32 %v902, %v903
    %v905 = vmul.f32 %v255, %v901
    %v906 = vmul.f32 %v262, %v269
    %v907 = vadd.f32 %v905, %v906
    %909 = vrot.lane.b32.xlu0 %v907, 64
    %v910 = vpop.permute.xlu0 %909
    %913 = vrot.lane.b32.xlu0 %v137, 96
    %v914 = vpop.permute.xlu0 %913
    %v916 = vsel %vm144, %v910, %v777
    %v917 = vsel %vm836, %v916, %v914
    %v918 = vpack.c.bf16 %v917, %v917
    %v919 = vld [vmem:[#allocation12] sm:$0xf]
    %v920 = vld [vmem:[#allocation12 + $0x4] sm:$0xf]
    %v921 = vld [vmem:[#allocation12 + $0x8] sm:$0xf]
    %v922 = vld [vmem:[#allocation12 + $0xc] sm:$0xf]
    %v923 = vld [vmem:[#allocation12 + $0x10] sm:$0xf]
    %v924 = vld [vmem:[#allocation12 + $0x14] sm:$0xf]
    %v925 = vld [vmem:[#allocation12 + $0x18] sm:$0xf]
    %v926 = vld [vmem:[#allocation12 + $0x1c] sm:$0xf]
    %v927 = vld [vmem:[#allocation12 + $0x20] sm:$0xf]
    %v928 = vld [vmem:[#allocation12 + $0x24] sm:$0xf]
    %v929 = vld [vmem:[#allocation12 + $0x28] sm:$0xf]
    %v930 = vld [vmem:[#allocation12 + $0x2c] sm:$0xf]
    %v931 = vld [vmem:[#allocation12 + $0x30] sm:$0xf]
    %v932 = vld [vmem:[#allocation12 + $0x34] sm:$0xf]
    %v933 = vld [vmem:[#allocation12 + $0x38] sm:$0xf]
    %v934 = vld [vmem:[#allocation12 + $0x3c] sm:$0xf]
    %v935 = vld [vmem:[%s13] sm:$0x1]
    %v937 = vlaneseq
    %v938 = vshrl.u32 %v937, 7
    %v939 = vsub.s32 0, %v938
    %v940 = vrot.slane %v935, %v939
    %v958 = vunpack.c.l.b16 %v919
    %v959 = vunpack.c.l.b16 %v920
    %v960 = vunpack.c.l.b16 %v921
    %v961 = vunpack.c.l.b16 %v922
    %v962 = vunpack.c.l.b16 %v923
    %v963 = vunpack.c.l.b16 %v924
    %v964 = vunpack.c.l.b16 %v925
    %v965 = vunpack.c.l.b16 %v926
    %v966 = vunpack.c.l.b16 %v927
    %v967 = vunpack.c.l.b16 %v928
    %v968 = vunpack.c.l.b16 %v929
    %v969 = vunpack.c.l.b16 %v930
    %v970 = vunpack.c.l.b16 %v931
    %v971 = vunpack.c.l.b16 %v932
    %v972 = vunpack.c.l.b16 %v933
    %v973 = vunpack.c.l.b16 %v934
    %v974 = vpack.c.b16 %v959, %v958
    %v975 = vpack.c.b16 %v961, %v960
    %v976 = vpack.c.b16 %v963, %v962
    %v977 = vpack.c.b16 %v965, %v964
    %v978 = vpack.c.b16 %v967, %v966
    %v979 = vpack.c.b16 %v969, %v968
    %v980 = vpack.c.b16 %v971, %v970
    %v981 = vpack.c.b16 %v973, %v972
    %990 = vmatprep.subr.bf16.mxu0 0
    %991 = vmatpush1.bf16.msra.mxu0 %v974
    %992 = vmatprep.subr.bf16.mxu0 0
    %993 = vmatpush1.bf16.msra.mxu0 %v975
    %994 = vmatprep.subr.bf16.mxu0 0
    %995 = vmatpush1.bf16.msra.mxu0 %v976
    %996 = vmatprep.subr.bf16.mxu0 0
    %997 = vmatpush1.bf16.msra.mxu0 %v977
    %998 = vmatprep.subr.bf16.mxu0 0
    %999 = vmatpush1.bf16.msra.mxu0 %v978
    %1000 = vmatprep.subr.bf16.mxu0 0
    %1001 = vmatpush1.bf16.msra.mxu0 %v979
    %1002 = vmatprep.subr.bf16.mxu0 0
    %1003 = vmatpush1.bf16.msra.mxu0 %v980
    %1004 = vmatprep.subr.bf16.mxu0 0
    %1005 = vmatpush1.bf16.msra.mxu0 %v981
    %1006 = vmatprep.subr.bf16.mxu0 0
    %1007 = vmatpush1.bf16.msra.mxu0 0
    %1008 = vmatprep.subr.bf16.mxu0 0
    %1009 = vmatpush1.bf16.msra.mxu0 0
    %1010 = vmatprep.subr.bf16.mxu0 0
    %1011 = vmatpush1.bf16.msra.mxu0 0
    %1012 = vmatprep.subr.bf16.mxu0 0
    %1013 = vmatpush1.bf16.msra.mxu0 0
    %1014 = vmatprep.subr.bf16.mxu0 0
    %1015 = vmatpush1.bf16.msra.mxu0 0
    %1016 = vmatprep.subr.bf16.mxu0 0
    %1017 = vmatpush1.bf16.msra.mxu0 0
    %1018 = vmatprep.subr.bf16.mxu0 0
    %1019 = vmatpush1.bf16.msra.mxu0 0
    %1020 = vmatprep.subr.bf16.mxu0 0
    %1021 = vmatpush1.bf16.msra.mxu0 0
    %1022 = vmatprep.mubr.bf16.mxu0 0
    %1023 = vmatmul.mubr.bf16.gmra.mrb[0].mxu0 %v918
    %v1024 = vpop.f32.mrb[0].mxu0
    %v1025 = vadd.f32 %v940, %v1024
    %v1026 = vpop.f32.mrb[0].mxu0
    %v1027 = vpop.f32.mrb[0].mxu0
    %v1028 = vpop.f32.mrb[0].mxu0
    %1029 = vdwg.mxu0
    %1030 = vmax.xlane.f32.xlu0 %v1025
    %v1031 = vpop.xlane.xlu0 %1030
    %v1032 = vsub.f32 %v1025, %v1031
    %v1033 = vmul.f32 %v1032, 1.442695
    %v1034 = vpow.pop %v1033
    %1035 = vadd.xlane.f32.xlu0 %v1034
    %v1036 = vpop.xlane.xlu0 %1035
    %v1037 = vrcp.pop %v1036
    %v1038 = vmul.f32 %v1034, %v1037
    %1039 = vst [vmem:[#allocation14] sm:$0xff] %v1038
    %v1040 = vsel %vm144, %v910, %v904
    %1041 = vst.msk [vmem:[#allocation2] sm:$0xff] %vm186, %v1040
    %1042 = vst.msk [vmem:[#allocation15] sm:$0xff] %vm186, %v1040
    // Predicated region
    $region86: #{tpu_custom_call.1} parent=1 // pred_check
      _
    $region87: #{tpu_custom_call.1} parent=1 // pred_check_branch
      %1044 = sbr.rel (0) target = $region89
    $region88: #{tpu_custom_call.1} parent=1 // pred_region
      %s1046 = ssub.s32 128, 128
      %1047 = vsyncadd [#allocation5], %s1046
      %s1049 = sshll.u32 [#allocation14], 4
      %s1050 = int_to_ptr.vmem [resolvable:$true] %s1049
      %1052 = dma.vmem_to_hbm [thread:$0]  %s1050, 128, %s14, [#allocation5]
    $region89: #{tpu_custom_call.1} parent=1 // pred_fallthru
      _
    // Predicated region
    $region90: #{tpu_custom_call.1} parent=1 // pred_check
      _
    $region91: #{tpu_custom_call.1} parent=1 // pred_check_branch
      %1054 = sbr.rel (0) target = $region93
    $region92: #{tpu_custom_call.1} parent=1 // pred_region
      %s1056 = ssub.s32 128, 128
      %1057 = vsyncadd [#allocation16], %s1056
      %s1059 = sshll.u32 [#allocation15], 4
      %s1060 = int_to_ptr.vmem [resolvable:$true] %s1059
      %1062 = dma.vmem_to_hbm [thread:$0]  %s1060, 128, %s15, [#allocation16]
    $region93: #{tpu_custom_call.1} parent=1 // pred_fallthru
      _
    // Predicated region
    $region94: #{tpu_custom_call.1} parent=1 // pred_check
      _
    $region95: #{tpu_custom_call.1} parent=1 // pred_check_branch
      %1064 = sbr.rel (0) target = $region97
    $region96: #{tpu_custom_call.1} parent=1 // pred_region
      %1065 = dma.done [#allocation5], 128
    $region97: #{tpu_custom_call.1} parent=1 // pred_fallthru
      _
    // Predicated region
    $region98: #{tpu_custom_call.1} parent=1 // pred_check
      _
    $region99: #{tpu_custom_call.1} parent=1 // pred_check_branch
      %1067 = sbr.rel (0) target = $region101
    $region100: #{tpu_custom_call.1} parent=1 // pred_region
      %1068 = dma.done [#allocation16], 128
    $region101: #{tpu_custom_call.1} parent=1 // pred_fallthru
      _
    %1069 = vsyncpa [#allocation4], 1
    %1070 = vsyncpa [#allocation7], 1
    %1071 = vsyncpa [#allocation10], 1
    %1072 = vsyncpa [#allocation13], 1
    %1073 = vsyncpa [#allocation5], 1
    %1074 = vsyncpa [#allocation16], 1

</llo_original>
